<compile_context>
chip_gen: v7x
topology: tpu7x:2x2x1
jax: 0.10.0
libtpu: 0.0.40
codegen_flags: <defaults>
</compile_context>

<pallas_src>
import math
import functools

import jax
import jax.numpy as jnp
from jax.experimental import pallas as pl
from jax.experimental.pallas import tpu as pltpu


# ---------------------------------------------------------------------------
# Fused kernel: proj + flash attention + out-proj + residual + LayerNorm
# ---------------------------------------------------------------------------
def _attn_prop_kernel(num_heads, head_dim, matmul_dtype,
                      q_ref, k_ref, v_ref,
                      wq_ref, bq_ref, wk_ref, bk_ref, wv_ref, bv_ref,
                      wo_ref, bo_ref, g_ref, beta_ref,
                      o_ref,
                      q_scr, m_scr, l_scr, acc_scr):
    H, hd = num_heads, head_dim
    ki = pl.program_id(2)

    def mm(a, b):
        # Full-fill MXU GEMM; optional bf16 operands, always f32 accumulation.
        return jnp.dot(a.astype(matmul_dtype), b.astype(matmul_dtype),
                       preferred_element_type=jnp.float32)

    def split_heads(x):
        # (rows, D) -> (H, rows, hd); static lane slices + leading-dim stack.
        return jnp.stack([x[:, h * hd:(h + 1) * hd] for h in range(H)], axis=0)

    q_in = q_ref[0]                                        # (tq, D), f32

    # ---- init for this (batch, query-tile): project Q once, reset stats ----
    @pl.when(ki == 0)
    def _():
        qp = mm(q_in, wq_ref[...]) + bq_ref[...]           # (tq, D); scale folded
        q_scr[...] = split_heads(qp)                       # (H, tq, hd)
        m_scr[...] = jnp.full(m_scr.shape, -jnp.inf, dtype=jnp.float32)
        l_scr[...] = jnp.zeros(l_scr.shape, dtype=jnp.float32)
        acc_scr[...] = jnp.zeros(acc_scr.shape, dtype=jnp.float32)

    # ---- K/V projection for this key tile (full-D GEMMs) -------------------
    kp = mm(k_ref[0], wk_ref[...]) + bk_ref[...]           # (tk, D)
    vp = mm(v_ref[0], wv_ref[...]) + bv_ref[...]           # (tk, D)
    kh = split_heads(kp)                                   # (H, tk, hd)
    vh = split_heads(vp)                                   # (H, tk, hd)

    # ---- online-softmax update (batched over heads) -------------------------
    s = jnp.einsum('hqe,hke->hqk', q_scr[...].astype(matmul_dtype),
                   kh.astype(matmul_dtype),
                   preferred_element_type=jnp.float32)     # (H, tq, tk)
    m_prev = m_scr[...]
    m_new = jnp.maximum(m_prev, jnp.max(s, axis=-1, keepdims=True))
    alpha = jnp.exp(m_prev - m_new)
    p = jnp.exp(s - m_new)                                 # unnormalized probs
    l_scr[...] = alpha * l_scr[...] + jnp.sum(p, axis=-1, keepdims=True)
    pv = jnp.einsum('hqk,hke->hqe', p.astype(matmul_dtype),
                    vh.astype(matmul_dtype),
                    preferred_element_type=jnp.float32)    # (H, tq, hd)
    acc_scr[...] = alpha * acc_scr[...] + pv
    m_scr[...] = m_new

    # ---- finalize: deferred normalization, out-proj, residual, LayerNorm ----
    @pl.when(ki == pl.num_programs(2) - 1)
    def _():
        inv_l = pl.reciprocal(l_scr[...], approx=True)     # EUP, (H, tq, 1)
        oh = acc_scr[...] * inv_l                          # (H, tq, hd)
        o_flat = jnp.concatenate([oh[h] for h in range(H)], axis=-1)  # (tq, D)
        out = mm(o_flat, wo_ref[...]) + bo_ref[...]        # single (D,D) GEMM
        x = q_in + out                                     # residual
        mu = jnp.mean(x, axis=-1, keepdims=True)
        var = jnp.mean((x - mu) ** 2, axis=-1, keepdims=True)
        o_ref[0] = ((x - mu) * jax.lax.rsqrt(var + 1e-5)
                    * g_ref[...] + beta_ref[...])


def attentional_propagation(query, key, value, kparams, num_heads, *,
                            block_q=None, block_k=None,
                            matmul_dtype=jnp.float32,
                            vmem_limit_bytes=48 * 1024 * 1024):
    """query: (B, N, D), key/value: (B, M, D) -> (B, N, D).

    block_q/block_k: flash tile sizes (must divide N / M; multiples of 8).
    At SuperGlue scale use e.g. block_q=256, block_k=512 (halve block_q on v7x,
    keep multiples of 128 on v5e); vmem_limit_bytes is kept < v7x's 64 MiB.
    """
    B, N, D = query.shape
    M = key.shape[1]
    H = num_heads
    hd = D // H
    tq = N if block_q is None else min(block_q, N)
    tk = M if block_k is None else min(block_k, M)
    assert N % tq == 0 and M % tk == 0

    kern = functools.partial(_attn_prop_kernel, H, hd, matmul_dtype)

    wspec = pl.BlockSpec((D, D), lambda b, qi, ki: (0, 0))   # resident weights
    bspec = pl.BlockSpec((1, D), lambda b, qi, ki: (0, 0))   # resident vectors

    return pl.pallas_call(
        kern,
        out_shape=jax.ShapeDtypeStruct((B, N, D), jnp.float32),
        grid=(B, N // tq, M // tk),
        in_specs=[
            pl.BlockSpec((1, tq, D), lambda b, qi, ki: (b, qi, 0)),   # query
            pl.BlockSpec((1, tk, D), lambda b, qi, ki: (b, ki, 0)),   # key
            pl.BlockSpec((1, tk, D), lambda b, qi, ki: (b, ki, 0)),   # value
            wspec, bspec,   # Wq (scale folded), bq (scale folded)
            wspec, bspec,   # Wk, bk
            wspec, bspec,   # Wv, bv
            wspec, bspec,   # Wo, bo
            bspec, bspec,   # LN gamma, beta
        ],
        out_specs=pl.BlockSpec((1, tq, D), lambda b, qi, ki: (b, qi, 0)),
        scratch_shapes=[
            pltpu.VMEM((H, tq, hd), jnp.float32),   # projected Q (per head)
            pltpu.VMEM((H, tq, 1), jnp.float32),    # running max m
            pltpu.VMEM((H, tq, 1), jnp.float32),    # running sum l
            pltpu.VMEM((H, tq, hd), jnp.float32),   # PV accumulator
        ],
        compiler_params=pltpu.CompilerParams(
            dimension_semantics=("parallel", "parallel", "arbitrary"),
            vmem_limit_bytes=vmem_limit_bytes),
    )(query, key, value,
      kparams["wq"], kparams["bq"], kparams["wk"], kparams["bk"],
      kparams["wv"], kparams["bv"], kparams["wo"], kparams["bo"],
      kparams["g"], kparams["b"])


# ---------------------------------------------------------------------------
# Parameter setup (PyTorch-layout weights -> kernel layout)
# ---------------------------------------------------------------------------
def init_torch_params(key, d):
    """PyTorch-layout params: Linear weights (out_features, in_features)."""
    ks = jax.random.split(key, 10)

    def w(k):
        return jax.random.normal(k, (d, d), jnp.float32) * (1.0 / math.sqrt(d))

    def bvec(k):
        return jax.random.normal(k, (d,), jnp.float32) * 0.1

    return dict(
        wq=w(ks[0]), bq=bvec(ks[1]),
        wk=w(ks[2]), bk=bvec(ks[3]),
        wv=w(ks[4]), bv=bvec(ks[5]),
        wo=w(ks[6]), bo=bvec(ks[7]),
        g=1.0 + 0.1 * jax.random.normal(ks[8], (d,), jnp.float32),
        b=0.1 * jax.random.normal(ks[9], (d,), jnp.float32),
    )


def prep_kernel_params(p, num_heads):
    """Pre-transpose full (D,D) weights (kernel does x @ W) and fold the
    1/sqrt(head_dim) attention scale into Wq/bq."""
    d = p["wq"].shape[0]
    hd = d // num_heads
    scale = jnp.float32(1.0 / math.sqrt(hd))
    return dict(
        wq=p["wq"].T * scale, bq=(p["bq"] * scale).reshape(1, d),
        wk=p["wk"].T,         bk=p["bk"].reshape(1, d),
        wv=p["wv"].T,         bv=p["bv"].reshape(1, d),
        wo=p["wo"].T,         bo=p["bo"].reshape(1, d),
        g=p["g"].reshape(1, d), b=p["b"].reshape(1, d),
    )


# ---------------------------------------------------------------------------
# Pure-JAX reference (mirrors the PyTorch forward) for validation
# ---------------------------------------------------------------------------
def attn_prop_reference(query, key, value, p, num_heads):
    B, N, D = query.shape
    M = key.shape[1]
    hd = D // num_heads
    hp = jax.lax.Precision.HIGHEST

    def lin(x, W, b):
        return jnp.einsum('bnd,ed->bne', x, W, precision=hp) + b

    Q = lin(query, p["wq"], p["bq"])
    K = lin(key, p["wk"], p["bk"])
    V = lin(value, p["wv"], p["bv"])
    Qh = Q.reshape(B, N, num_heads, hd).transpose(0, 2, 1, 3)
    Kh = K.reshape(B, M, num_heads, hd).transpose(0, 2, 1, 3)
    Vh = V.reshape(B, M, num_heads, hd).transpose(0, 2, 1, 3)
    s = jnp.einsum('bhnd,bhmd->bhnm', Qh, Kh, precision=hp) / math.sqrt(hd)
    a = jax.nn.softmax(s, axis=-1)
    o = jnp.einsum('bhnm,bhmd->bhnd', a, Vh, precision=hp)
    o = o.transpose(0, 2, 1, 3).reshape(B, N, D)
    out = lin(o, p["wo"], p["bo"])
    x = query + out
    mu = jnp.mean(x, axis=-1, keepdims=True)
    var = jnp.mean((x - mu) ** 2, axis=-1, keepdims=True)
    return (x - mu) / jnp.sqrt(var + 1e-5) * p["g"] + p["b"]


if __name__ == "__main__":
    key = jax.random.PRNGKey(0)
    kq, kk, kv, kp = jax.random.split(key, 4)

    B, N, M, D, H = 2, 16, 16, 32, 4
    query = jax.random.normal(kq, (B, N, D), jnp.float32)
    key_t = jax.random.normal(kk, (B, M, D), jnp.float32)
    value = jax.random.normal(kv, (B, M, D), jnp.float32)

    torch_params = init_torch_params(kp, D)
    kernel_params = prep_kernel_params(torch_params, H)
    ref = attn_prop_reference(query, key_t, value, torch_params, H)

    # f32-operand path; blocks chosen so the flash tiling (init/accumulate/
    # finalize across key tiles) is actually exercised: grid = (2, 2, 2).
    out = attentional_propagation(query, key_t, value, kernel_params, H,
                                  block_q=8, block_k=8)
    out = jax.block_until_ready(out)
    assert out.shape == (B, N, D) and out.dtype == jnp.float32
    assert bool(jnp.all(jnp.isfinite(out)))
    max_err = float(jnp.max(jnp.abs(out - ref)))
    assert max_err < 5e-2, f"f32 path mismatch vs reference: max abs err {max_err}"

    # bf16 matmul-operand path (f32 accumulation) — looser tolerance.
    out_bf16 = attentional_propagation(query, key_t, value, kernel_params, H,
                                       block_q=8, block_k=8,
                                       matmul_dtype=jnp.bfloat16)
    out_bf16 = jax.block_until_ready(out_bf16)
    assert bool(jnp.all(jnp.isfinite(out_bf16)))
    max_err_bf16 = float(jnp.max(jnp.abs(out_bf16 - ref)))
    assert max_err_bf16 < 2e-1, f"bf16 path mismatch: max abs err {max_err_bf16}"

    print("KERNEL_OK")
</pallas_src>

<mosaic_0001>
module attributes {stable_mosaic.version = 11 : i64} {
  func.func @_attn_prop_kernel(%arg0: i32, %arg1: i32, %arg2: i32, %arg3: memref<1x8x32xf32, #tpu.memory_space<vmem>>, %arg4: memref<1x8x32xf32, #tpu.memory_space<vmem>>, %arg5: memref<1x8x32xf32, #tpu.memory_space<vmem>>, %arg6: memref<32x32xf32, #tpu.memory_space<vmem>>, %arg7: memref<1x32xf32, #tpu.memory_space<vmem>>, %arg8: memref<32x32xf32, #tpu.memory_space<vmem>>, %arg9: memref<1x32xf32, #tpu.memory_space<vmem>>, %arg10: memref<32x32xf32, #tpu.memory_space<vmem>>, %arg11: memref<1x32xf32, #tpu.memory_space<vmem>>, %arg12: memref<32x32xf32, #tpu.memory_space<vmem>>, %arg13: memref<1x32xf32, #tpu.memory_space<vmem>>, %arg14: memref<1x32xf32, #tpu.memory_space<vmem>>, %arg15: memref<1x32xf32, #tpu.memory_space<vmem>>, %arg16: memref<1x8x32xf32, #tpu.memory_space<vmem>>, %arg17: memref<4x8x8xf32, #tpu.memory_space<vmem>>, %arg18: memref<4x8x1xf32, #tpu.memory_space<vmem>>, %arg19: memref<4x8x1xf32, #tpu.memory_space<vmem>>, %arg20: memref<4x8x8xf32, #tpu.memory_space<vmem>>) attributes {dimension_semantics = [#tpu.dimension_semantics<parallel>, #tpu.dimension_semantics<parallel>, #tpu.dimension_semantics<arbitrary>], iteration_bounds = array<i64: 2, 2, 2>, scalar_prefetch = 0 : i64, scratch_operands = 4 : i64, tpu.core_type = #tpu.core_type<tc>, window_params = [{transform_indices = @transform_0, window_bounds = array<i64: 1, 8, 32>}, {transform_indices = @transform_1, window_bounds = array<i64: 1, 8, 32>}, {transform_indices = @transform_2, window_bounds = array<i64: 1, 8, 32>}, {pipeline_mode = #tpu.pipeline_mode<synchronous>, transform_indices = @transform_3, window_bounds = array<i64: 32, 32>}, {pipeline_mode = #tpu.pipeline_mode<synchronous>, transform_indices = @transform_4, window_bounds = array<i64: 1, 32>}, {pipeline_mode = #tpu.pipeline_mode<synchronous>, transform_indices = @transform_5, window_bounds = array<i64: 32, 32>}, {pipeline_mode = #tpu.pipeline_mode<synchronous>, transform_indices = @transform_6, window_bounds = array<i64: 1, 32>}, {pipeline_mode = #tpu.pipeline_mode<synchronous>, transform_indices = @transform_7, window_bounds = array<i64: 32, 32>}, {pipeline_mode = #tpu.pipeline_mode<synchronous>, transform_indices = @transform_8, window_bounds = array<i64: 1, 32>}, {pipeline_mode = #tpu.pipeline_mode<synchronous>, transform_indices = @transform_9, window_bounds = array<i64: 32, 32>}, {pipeline_mode = #tpu.pipeline_mode<synchronous>, transform_indices = @transform_10, window_bounds = array<i64: 1, 32>}, {pipeline_mode = #tpu.pipeline_mode<synchronous>, transform_indices = @transform_11, window_bounds = array<i64: 1, 32>}, {pipeline_mode = #tpu.pipeline_mode<synchronous>, transform_indices = @transform_12, window_bounds = array<i64: 1, 32>}, {transform_indices = @transform_13, window_bounds = array<i64: 1, 8, 32>}]} {
    %c0 = arith.constant 0 : index
    %c0_0 = arith.constant 0 : index
    %c0_1 = arith.constant 0 : index
    %0 = vector.load %arg3[%c0, %c0_0, %c0_1] : memref<1x8x32xf32, #tpu.memory_space<vmem>>, vector<1x8x32xf32>
    %1 = vector.shape_cast %0 : vector<1x8x32xf32> to vector<8x32xf32>
    %c0_i32 = arith.constant 0 : i32
    %2 = arith.cmpi eq, %arg2, %c0_i32 : i32
    %3 = arith.extui %2 : i1 to i32
    %c0_i32_2 = arith.constant 0 : i32
    %4 = arith.cmpi ne, %3, %c0_i32_2 : i32
    scf.if %4 {
      %c0_44 = arith.constant 0 : index
      %c0_45 = arith.constant 0 : index
      %64 = vector.load %arg6[%c0_44, %c0_45] : memref<32x32xf32, #tpu.memory_space<vmem>>, vector<32x32xf32>
      %cst_46 = arith.constant dense<0.000000e+00> : vector<8x32xf32>
      %65 = tpu.matmul %1, %64, %cst_46 {dimension_numbers = #tpu.dot_dimension_numbers<[1], [0], [0], [1], [0, 0, 1, 1], [], []>} : vector<8x32xf32>, vector<32x32xf32>, vector<8x32xf32> -> vector<8x32xf32>
      %c0_47 = arith.constant 0 : index
      %c0_48 = arith.constant 0 : index
      %66 = vector.load %arg7[%c0_47, %c0_48] : memref<1x32xf32, #tpu.memory_space<vmem>>, vector<1x32xf32>
      %67 = vector.broadcast %66 : vector<1x32xf32> to vector<8x32xf32>
      %68 = arith.addf %65, %67 : vector<8x32xf32>
      %69 = vector.extract_strided_slice %68 {offsets = [0, 0], sizes = [8, 8], strides = [1, 1]} : vector<8x32xf32> to vector<8x8xf32>
      %70 = vector.extract_strided_slice %68 {offsets = [0, 8], sizes = [8, 8], strides = [1, 1]} : vector<8x32xf32> to vector<8x8xf32>
      %71 = vector.extract_strided_slice %68 {offsets = [0, 16], sizes = [8, 8], strides = [1, 1]} : vector<8x32xf32> to vector<8x8xf32>
      %72 = vector.extract_strided_slice %68 {offsets = [0, 24], sizes = [8, 8], strides = [1, 1]} : vector<8x32xf32> to vector<8x8xf32>
      %73 = vector.shape_cast %69 : vector<8x8xf32> to vector<1x8x8xf32>
      %74 = vector.shape_cast %70 : vector<8x8xf32> to vector<1x8x8xf32>
      %75 = vector.shape_cast %71 : vector<8x8xf32> to vector<1x8x8xf32>
      %76 = vector.shape_cast %72 : vector<8x8xf32> to vector<1x8x8xf32>
      %77 = tpu.concatenate %73, %74, %75, %76 in 0 : vector<1x8x8xf32>, vector<1x8x8xf32>, vector<1x8x8xf32>, vector<1x8x8xf32> -> vector<4x8x8xf32>
      %c0_49 = arith.constant 0 : index
      %c0_50 = arith.constant 0 : index
      %c0_51 = arith.constant 0 : index
      %78 = vector.load %arg17[%c0_49, %c0_50, %c0_51] : memref<4x8x8xf32, #tpu.memory_space<vmem>>, vector<4x8x8xf32>
      tpu.vector_store %arg17[%c0_49, %c0_50, %c0_51], %77 {strides = array<i32>} : memref<4x8x8xf32, #tpu.memory_space<vmem>>, vector<4x8x8xf32>,
      %cst_52 = arith.constant 0xFF800000 : f32
      %79 = vector.broadcast %cst_52 : f32 to vector<4x8x1xf32>
      %c0_53 = arith.constant 0 : index
      %c0_54 = arith.constant 0 : index
      %c0_55 = arith.constant 0 : index
      %80 = vector.load %arg18[%c0_53, %c0_54, %c0_55] : memref<4x8x1xf32, #tpu.memory_space<vmem>>, vector<4x8x1xf32>
      tpu.vector_store %arg18[%c0_53, %c0_54, %c0_55], %79 {strides = array<i32>} : memref<4x8x1xf32, #tpu.memory_space<vmem>>, vector<4x8x1xf32>,
      %cst_56 = arith.constant 0.000000e+00 : f32
      %81 = vector.broadcast %cst_56 : f32 to vector<4x8x1xf32>
      %c0_57 = arith.constant 0 : index
      %c0_58 = arith.constant 0 : index
      %c0_59 = arith.constant 0 : index
      %82 = vector.load %arg19[%c0_57, %c0_58, %c0_59] : memref<4x8x1xf32, #tpu.memory_space<vmem>>, vector<4x8x1xf32>
      tpu.vector_store %arg19[%c0_57, %c0_58, %c0_59], %81 {strides = array<i32>} : memref<4x8x1xf32, #tpu.memory_space<vmem>>, vector<4x8x1xf32>,
      %cst_60 = arith.constant 0.000000e+00 : f32
      %83 = vector.broadcast %cst_60 : f32 to vector<4x8x8xf32>
      %c0_61 = arith.constant 0 : index
      %c0_62 = arith.constant 0 : index
      %c0_63 = arith.constant 0 : index
      %84 = vector.load %arg20[%c0_61, %c0_62, %c0_63] : memref<4x8x8xf32, #tpu.memory_space<vmem>>, vector<4x8x8xf32>
      tpu.vector_store %arg20[%c0_61, %c0_62, %c0_63], %83 {strides = array<i32>} : memref<4x8x8xf32, #tpu.memory_space<vmem>>, vector<4x8x8xf32>,
    } else {
    }
    %c0_3 = arith.constant 0 : index
    %c0_4 = arith.constant 0 : index
    %c0_5 = arith.constant 0 : index
    %5 = vector.load %arg4[%c0_3, %c0_4, %c0_5] : memref<1x8x32xf32, #tpu.memory_space<vmem>>, vector<1x8x32xf32>
    %6 = vector.shape_cast %5 : vector<1x8x32xf32> to vector<8x32xf32>
    %c0_6 = arith.constant 0 : index
    %c0_7 = arith.constant 0 : index
    %7 = vector.load %arg8[%c0_6, %c0_7] : memref<32x32xf32, #tpu.memory_space<vmem>>, vector<32x32xf32>
    %cst = arith.constant dense<0.000000e+00> : vector<8x32xf32>
    %8 = tpu.matmul %6, %7, %cst {dimension_numbers = #tpu.dot_dimension_numbers<[1], [0], [0], [1], [0, 0, 1, 1], [], []>} : vector<8x32xf32>, vector<32x32xf32>, vector<8x32xf32> -> vector<8x32xf32>
    %c0_8 = arith.constant 0 : index
    %c0_9 = arith.constant 0 : index
    %9 = vector.load %arg9[%c0_8, %c0_9] : memref<1x32xf32, #tpu.memory_space<vmem>>, vector<1x32xf32>
    %10 = vector.broadcast %9 : vector<1x32xf32> to vector<8x32xf32>
    %11 = arith.addf %8, %10 : vector<8x32xf32>
    %c0_10 = arith.constant 0 : index
    %c0_11 = arith.constant 0 : index
    %c0_12 = arith.constant 0 : index
    %12 = vector.load %arg5[%c0_10, %c0_11, %c0_12] : memref<1x8x32xf32, #tpu.memory_space<vmem>>, vector<1x8x32xf32>
    %13 = vector.shape_cast %12 : vector<1x8x32xf32> to vector<8x32xf32>
    %c0_13 = arith.constant 0 : index
    %c0_14 = arith.constant 0 : index
    %14 = vector.load %arg10[%c0_13, %c0_14] : memref<32x32xf32, #tpu.memory_space<vmem>>, vector<32x32xf32>
    %cst_15 = arith.constant dense<0.000000e+00> : vector<8x32xf32>
    %15 = tpu.matmul %13, %14, %cst_15 {dimension_numbers = #tpu.dot_dimension_numbers<[1], [0], [0], [1], [0, 0, 1, 1], [], []>} : vector<8x32xf32>, vector<32x32xf32>, vector<8x32xf32> -> vector<8x32xf32>
    %c0_16 = arith.constant 0 : index
    %c0_17 = arith.constant 0 : index
    %16 = vector.load %arg11[%c0_16, %c0_17] : memref<1x32xf32, #tpu.memory_space<vmem>>, vector<1x32xf32>
    %17 = vector.broadcast %16 : vector<1x32xf32> to vector<8x32xf32>
    %18 = arith.addf %15, %17 : vector<8x32xf32>
    %19 = vector.extract_strided_slice %11 {offsets = [0, 0], sizes = [8, 8], strides = [1, 1]} : vector<8x32xf32> to vector<8x8xf32>
    %20 = vector.extract_strided_slice %11 {offsets = [0, 8], sizes = [8, 8], strides = [1, 1]} : vector<8x32xf32> to vector<8x8xf32>
    %21 = vector.extract_strided_slice %11 {offsets = [0, 16], sizes = [8, 8], strides = [1, 1]} : vector<8x32xf32> to vector<8x8xf32>
    %22 = vector.extract_strided_slice %11 {offsets = [0, 24], sizes = [8, 8], strides = [1, 1]} : vector<8x32xf32> to vector<8x8xf32>
    %23 = vector.shape_cast %19 : vector<8x8xf32> to vector<1x8x8xf32>
    %24 = vector.shape_cast %20 : vector<8x8xf32> to vector<1x8x8xf32>
    %25 = vector.shape_cast %21 : vector<8x8xf32> to vector<1x8x8xf32>
    %26 = vector.shape_cast %22 : vector<8x8xf32> to vector<1x8x8xf32>
    %27 = tpu.concatenate %23, %24, %25, %26 in 0 : vector<1x8x8xf32>, vector<1x8x8xf32>, vector<1x8x8xf32>, vector<1x8x8xf32> -> vector<4x8x8xf32>
    %28 = vector.extract_strided_slice %18 {offsets = [0, 0], sizes = [8, 8], strides = [1, 1]} : vector<8x32xf32> to vector<8x8xf32>
    %29 = vector.extract_strided_slice %18 {offsets = [0, 8], sizes = [8, 8], strides = [1, 1]} : vector<8x32xf32> to vector<8x8xf32>
    %30 = vector.extract_strided_slice %18 {offsets = [0, 16], sizes = [8, 8], strides = [1, 1]} : vector<8x32xf32> to vector<8x8xf32>
    %31 = vector.extract_strided_slice %18 {offsets = [0, 24], sizes = [8, 8], strides = [1, 1]} : vector<8x32xf32> to vector<8x8xf32>
    %32 = vector.shape_cast %28 : vector<8x8xf32> to vector<1x8x8xf32>
    %33 = vector.shape_cast %29 : vector<8x8xf32> to vector<1x8x8xf32>
    %34 = vector.shape_cast %30 : vector<8x8xf32> to vector<1x8x8xf32>
    %35 = vector.shape_cast %31 : vector<8x8xf32> to vector<1x8x8xf32>
    %36 = tpu.concatenate %32, %33, %34, %35 in 0 : vector<1x8x8xf32>, vector<1x8x8xf32>, vector<1x8x8xf32>, vector<1x8x8xf32> -> vector<4x8x8xf32>
    %c0_18 = arith.constant 0 : index
    %c0_19 = arith.constant 0 : index
    %c0_20 = arith.constant 0 : index
    %37 = vector.load %arg17[%c0_18, %c0_19, %c0_20] : memref<4x8x8xf32, #tpu.memory_space<vmem>>, vector<4x8x8xf32>
    "tpu.trace_start"() <{level = 10 : i32, message = "hqe,hke->hqk"}> : () -> ()
    %cst_21 = arith.constant dense<0.000000e+00> : vector<4x8x8xf32>
    %38 = tpu.matmul %37, %27, %cst_21 {dimension_numbers = #tpu.dot_dimension_numbers<[2], [2], [1], [1], [0, 0, 0, 1, 1, 1], [0], [0]>} : vector<4x8x8xf32>, vector<4x8x8xf32>, vector<4x8x8xf32> -> vector<4x8x8xf32>
    "tpu.trace_stop"() : () -> ()
    %c0_22 = arith.constant 0 : index
    %c0_23 = arith.constant 0 : index
    %c0_24 = arith.constant 0 : index
    %39 = vector.load %arg18[%c0_22, %c0_23, %c0_24] : memref<4x8x1xf32, #tpu.memory_space<vmem>>, vector<4x8x1xf32>
    %cst_25 = arith.constant dense<0xFF800000> : vector<4x8xf32>
    %40 = vector.multi_reduction <maximumf>, %38, %cst_25 [2] : vector<4x8x8xf32> to vector<4x8xf32>
    %41 = vector.shape_cast %40 : vector<4x8xf32> to vector<4x8x1xf32>
    %42 = arith.maximumf %39, %41 : vector<4x8x1xf32>
    %43 = arith.subf %39, %42 : vector<4x8x1xf32>
    %44 = math.exp %43 : vector<4x8x1xf32>
    %45 = vector.broadcast %42 : vector<4x8x1xf32> to vector<4x8x8xf32>
    %46 = arith.subf %38, %45 : vector<4x8x8xf32>
    %47 = math.exp %46 : vector<4x8x8xf32>
    %c0_26 = arith.constant 0 : index
    %c0_27 = arith.constant 0 : index
    %c0_28 = arith.constant 0 : index
    %48 = vector.load %arg19[%c0_26, %c0_27, %c0_28] : memref<4x8x1xf32, #tpu.memory_space<vmem>>, vector<4x8x1xf32>
    %49 = arith.mulf %44, %48 : vector<4x8x1xf32>
    %cst_29 = arith.constant dense<0.000000e+00> : vector<4x8xf32>
    %50 = vector.multi_reduction <add>, %47, %cst_29 [2] : vector<4x8x8xf32> to vector<4x8xf32>
    %51 = vector.shape_cast %50 : vector<4x8xf32> to vector<4x8x1xf32>
    %52 = arith.addf %49, %51 : vector<4x8x1xf32>
    %c0_30 = arith.constant 0 : index
    %c0_31 = arith.constant 0 : index
    %c0_32 = arith.constant 0 : index
    %53 = vector.load %arg19[%c0_30, %c0_31, %c0_32] : memref<4x8x1xf32, #tpu.memory_space<vmem>>, vector<4x8x1xf32>
    tpu.vector_store %arg19[%c0_30, %c0_31, %c0_32], %52 {strides = array<i32>} : memref<4x8x1xf32, #tpu.memory_space<vmem>>, vector<4x8x1xf32>,
    "tpu.trace_start"() <{level = 10 : i32, message = "hqk,hke->hqe"}> : () -> ()
    %cst_33 = arith.constant dense<0.000000e+00> : vector<4x8x8xf32>
    %54 = tpu.matmul %47, %36, %cst_33 {dimension_numbers = #tpu.dot_dimension_numbers<[2], [1], [1], [2], [0, 0, 0, 1, 1, 2], [0], [0]>} : vector<4x8x8xf32>, vector<4x8x8xf32>, vector<4x8x8xf32> -> vector<4x8x8xf32>
    "tpu.trace_stop"() : () -> ()
    %c0_34 = arith.constant 0 : index
    %c0_35 = arith.constant 0 : index
    %c0_36 = arith.constant 0 : index
    %55 = vector.load %arg20[%c0_34, %c0_35, %c0_36] : memref<4x8x8xf32, #tpu.memory_space<vmem>>, vector<4x8x8xf32>
    %56 = vector.broadcast %44 : vector<4x8x1xf32> to vector<4x8x8xf32>
    %57 = arith.mulf %56, %55 : vector<4x8x8xf32>
    %58 = arith.addf %57, %54 : vector<4x8x8xf32>
    %c0_37 = arith.constant 0 : index
    %c0_38 = arith.constant 0 : index
    %c0_39 = arith.constant 0 : index
    %59 = vector.load %arg20[%c0_37, %c0_38, %c0_39] : memref<4x8x8xf32, #tpu.memory_space<vmem>>, vector<4x8x8xf32>
    tpu.vector_store %arg20[%c0_37, %c0_38, %c0_39], %58 {strides = array<i32>} : memref<4x8x8xf32, #tpu.memory_space<vmem>>, vector<4x8x8xf32>,
    %c0_40 = arith.constant 0 : index
    %c0_41 = arith.constant 0 : index
    %c0_42 = arith.constant 0 : index
    %60 = vector.load %arg18[%c0_40, %c0_41, %c0_42] : memref<4x8x1xf32, #tpu.memory_space<vmem>>, vector<4x8x1xf32>
    tpu.vector_store %arg18[%c0_40, %c0_41, %c0_42], %42 {strides = array<i32>} : memref<4x8x1xf32, #tpu.memory_space<vmem>>, vector<4x8x1xf32>,
    %c1_i32 = arith.constant 1 : i32
    %61 = arith.cmpi eq, %arg2, %c1_i32 : i32
    %62 = arith.extui %61 : i1 to i32
    %c0_i32_43 = arith.constant 0 : i32
    %63 = arith.cmpi ne, %62, %c0_i32_43 : i32
    scf.if %63 {
      %c0_44 = arith.constant 0 : index
      %c0_45 = arith.constant 0 : index
      %c0_46 = arith.constant 0 : index
      %64 = vector.load %arg19[%c0_44, %c0_45, %c0_46] : memref<4x8x1xf32, #tpu.memory_space<vmem>>, vector<4x8x1xf32>
      %65 = tpu.reciprocal %64 {approx = true} : vector<4x8x1xf32> -> vector<4x8x1xf32>
      %c0_47 = arith.constant 0 : index
      %c0_48 = arith.constant 0 : index
      %c0_49 = arith.constant 0 : index
      %66 = vector.load %arg20[%c0_47, %c0_48, %c0_49] : memref<4x8x8xf32, #tpu.memory_space<vmem>>, vector<4x8x8xf32>
      %67 = vector.broadcast %65 : vector<4x8x1xf32> to vector<4x8x8xf32>
      %68 = arith.mulf %66, %67 : vector<4x8x8xf32>
      %69 = vector.extract_strided_slice %68 {offsets = [0, 0, 0], sizes = [1, 8, 8], strides = [1, 1, 1]} : vector<4x8x8xf32> to vector<1x8x8xf32>
      %70 = vector.shape_cast %69 : vector<1x8x8xf32> to vector<8x8xf32>
      %71 = vector.extract_strided_slice %68 {offsets = [1, 0, 0], sizes = [1, 8, 8], strides = [1, 1, 1]} : vector<4x8x8xf32> to vector<1x8x8xf32>
      %72 = vector.shape_cast %71 : vector<1x8x8xf32> to vector<8x8xf32>
      %73 = vector.extract_strided_slice %68 {offsets = [2, 0, 0], sizes = [1, 8, 8], strides = [1, 1, 1]} : vector<4x8x8xf32> to vector<1x8x8xf32>
      %74 = vector.shape_cast %73 : vector<1x8x8xf32> to vector<8x8xf32>
      %75 = vector.extract_strided_slice %68 {offsets = [3, 0, 0], sizes = [1, 8, 8], strides = [1, 1, 1]} : vector<4x8x8xf32> to vector<1x8x8xf32>
      %76 = vector.shape_cast %75 : vector<1x8x8xf32> to vector<8x8xf32>
      %77 = tpu.concatenate %70, %72, %74, %76 in 1 : vector<8x8xf32>, vector<8x8xf32>, vector<8x8xf32>, vector<8x8xf32> -> vector<8x32xf32>
      %c0_50 = arith.constant 0 : index
      %c0_51 = arith.constant 0 : index
      %78 = vector.load %arg12[%c0_50, %c0_51] : memref<32x32xf32, #tpu.memory_space<vmem>>, vector<32x32xf32>
      %cst_52 = arith.constant dense<0.000000e+00> : vector<8x32xf32>
      %79 = tpu.matmul %77, %78, %cst_52 {dimension_numbers = #tpu.dot_dimension_numbers<[1], [0], [0], [1], [0, 0, 1, 1], [], []>} : vector<8x32xf32>, vector<32x32xf32>, vector<8x32xf32> -> vector<8x32xf32>
      %c0_53 = arith.constant 0 : index
      %c0_54 = arith.constant 0 : index
      %80 = vector.load %arg13[%c0_53, %c0_54] : memref<1x32xf32, #tpu.memory_space<vmem>>, vector<1x32xf32>
      %81 = vector.broadcast %80 : vector<1x32xf32> to vector<8x32xf32>
      %82 = arith.addf %79, %81 : vector<8x32xf32>
      %83 = arith.addf %1, %82 : vector<8x32xf32>
      %cst_55 = arith.constant dense<0.000000e+00> : vector<8xf32>
      %84 = vector.multi_reduction <add>, %83, %cst_55 [1] : vector<8x32xf32> to vector<8xf32>
      %85 = vector.shape_cast %84 : vector<8xf32> to vector<8x1xf32>
      %cst_56 = arith.constant 3.200000e+01 : f32
      %86 = vector.broadcast %cst_56 : f32 to vector<8x1xf32>
      %87 = arith.divf %85, %86 : vector<8x1xf32>
      %88 = vector.broadcast %87 : vector<8x1xf32> to vector<8x32xf32>
      %89 = arith.subf %83, %88 : vector<8x32xf32>
      %90 = arith.mulf %89, %89 : vector<8x32xf32>
      %cst_57 = arith.constant dense<0.000000e+00> : vector<8xf32>
      %91 = vector.multi_reduction <add>, %90, %cst_57 [1] : vector<8x32xf32> to vector<8xf32>
      %92 = vector.shape_cast %91 : vector<8xf32> to vector<8x1xf32>
      %cst_58 = arith.constant 3.200000e+01 : f32
      %93 = vector.broadcast %cst_58 : f32 to vector<8x1xf32>
      %94 = arith.divf %92, %93 : vector<8x1xf32>
      %95 = vector.broadcast %87 : vector<8x1xf32> to vector<8x32xf32>
      %96 = arith.subf %83, %95 : vector<8x32xf32>
      %cst_59 = arith.constant 9.99999974E-6 : f32
      %97 = vector.broadcast %cst_59 : f32 to vector<8x1xf32>
      %98 = arith.addf %94, %97 : vector<8x1xf32>
      %99 = math.rsqrt %98 : vector<8x1xf32>
      %100 = vector.broadcast %99 : vector<8x1xf32> to vector<8x32xf32>
      %101 = arith.mulf %96, %100 : vector<8x32xf32>
      %c0_60 = arith.constant 0 : index
      %c0_61 = arith.constant 0 : index
      %102 = vector.load %arg14[%c0_60, %c0_61] : memref<1x32xf32, #tpu.memory_space<vmem>>, vector<1x32xf32>
      %103 = vector.broadcast %102 : vector<1x32xf32> to vector<8x32xf32>
      %104 = arith.mulf %101, %103 : vector<8x32xf32>
      %c0_62 = arith.constant 0 : index
      %c0_63 = arith.constant 0 : index
      %105 = vector.load %arg15[%c0_62, %c0_63] : memref<1x32xf32, #tpu.memory_space<vmem>>, vector<1x32xf32>
      %106 = vector.broadcast %105 : vector<1x32xf32> to vector<8x32xf32>
      %107 = arith.addf %104, %106 : vector<8x32xf32>
      %c0_64 = arith.constant 0 : index
      %c0_65 = arith.constant 0 : index
      %c0_66 = arith.constant 0 : index
      %108 = vector.load %arg16[%c0_64, %c0_65, %c0_66] : memref<1x8x32xf32, #tpu.memory_space<vmem>>, vector<1x8x32xf32>
      %109 = vector.shape_cast %108 : vector<1x8x32xf32> to vector<8x32xf32>
      %110 = vector.shape_cast %107 : vector<8x32xf32> to vector<1x8x32xf32>
      tpu.vector_store %arg16[%c0_64, %c0_65, %c0_66], %110 {strides = array<i32>} : memref<1x8x32xf32, #tpu.memory_space<vmem>>, vector<1x8x32xf32>,
    } else {
    }
    return
  }
  func.func @transform_0(%arg0: i32, %arg1: i32, %arg2: i32) -> (i32, i32, i32) {
    %c0_i32 = arith.constant 0 : i32
    %c0_i32_0 = arith.constant 0 : i32
    return %arg0, %arg1, %c0_i32 : i32, i32, i32
  }
  func.func @transform_1(%arg0: i32, %arg1: i32, %arg2: i32) -> (i32, i32, i32) {
    %c0_i32 = arith.constant 0 : i32
    %c0_i32_0 = arith.constant 0 : i32
    return %arg0, %arg2, %c0_i32 : i32, i32, i32
  }
  func.func @transform_2(%arg0: i32, %arg1: i32, %arg2: i32) -> (i32, i32, i32) {
    %c0_i32 = arith.constant 0 : i32
    %c0_i32_0 = arith.constant 0 : i32
    return %arg0, %arg2, %c0_i32 : i32, i32, i32
  }
  func.func @transform_3(%arg0: i32, %arg1: i32, %arg2: i32) -> (i32, i32) {
    %c0_i32 = arith.constant 0 : i32
    %c0_i32_0 = arith.constant 0 : i32
    %c0_i32_1 = arith.constant 0 : i32
    return %c0_i32, %c0_i32_0 : i32, i32
  }
  func.func @transform_4(%arg0: i32, %arg1: i32, %arg2: i32) -> (i32, i32) {
    %c0_i32 = arith.constant 0 : i32
    %c0_i32_0 = arith.constant 0 : i32
    %c0_i32_1 = arith.constant 0 : i32
    return %c0_i32, %c0_i32_0 : i32, i32
  }
  func.func @transform_5(%arg0: i32, %arg1: i32, %arg2: i32) -> (i32, i32) {
    %c0_i32 = arith.constant 0 : i32
    %c0_i32_0 = arith.constant 0 : i32
    %c0_i32_1 = arith.constant 0 : i32
    return %c0_i32, %c0_i32_0 : i32, i32
  }
  func.func @transform_6(%arg0: i32, %arg1: i32, %arg2: i32) -> (i32, i32) {
    %c0_i32 = arith.constant 0 : i32
    %c0_i32_0 = arith.constant 0 : i32
    %c0_i32_1 = arith.constant 0 : i32
    return %c0_i32, %c0_i32_0 : i32, i32
  }
  func.func @transform_7(%arg0: i32, %arg1: i32, %arg2: i32) -> (i32, i32) {
    %c0_i32 = arith.constant 0 : i32
    %c0_i32_0 = arith.constant 0 : i32
    %c0_i32_1 = arith.constant 0 : i32
    return %c0_i32, %c0_i32_0 : i32, i32
  }
  func.func @transform_8(%arg0: i32, %arg1: i32, %arg2: i32) -> (i32, i32) {
    %c0_i32 = arith.constant 0 : i32
    %c0_i32_0 = arith.constant 0 : i32
    %c0_i32_1 = arith.constant 0 : i32
    return %c0_i32, %c0_i32_0 : i32, i32
  }
  func.func @transform_9(%arg0: i32, %arg1: i32, %arg2: i32) -> (i32, i32) {
    %c0_i32 = arith.constant 0 : i32
    %c0_i32_0 = arith.constant 0 : i32
    %c0_i32_1 = arith.constant 0 : i32
    return %c0_i32, %c0_i32_0 : i32, i32
  }
  func.func @transform_10(%arg0: i32, %arg1: i32, %arg2: i32) -> (i32, i32) {
    %c0_i32 = arith.constant 0 : i32
    %c0_i32_0 = arith.constant 0 : i32
    %c0_i32_1 = arith.constant 0 : i32
    return %c0_i32, %c0_i32_0 : i32, i32
  }
  func.func @transform_11(%arg0: i32, %arg1: i32, %arg2: i32) -> (i32, i32) {
    %c0_i32 = arith.constant 0 : i32
    %c0_i32_0 = arith.constant 0 : i32
    %c0_i32_1 = arith.constant 0 : i32
    return %c0_i32, %c0_i32_0 : i32, i32
  }
  func.func @transform_12(%arg0: i32, %arg1: i32, %arg2: i32) -> (i32, i32) {
    %c0_i32 = arith.constant 0 : i32
    %c0_i32_0 = arith.constant 0 : i32
    %c0_i32_1 = arith.constant 0 : i32
    return %c0_i32, %c0_i32_0 : i32, i32
  }
  func.func @transform_13(%arg0: i32, %arg1: i32, %arg2: i32) -> (i32, i32, i32) {
    %c0_i32 = arith.constant 0 : i32
    %c0_i32_0 = arith.constant 0 : i32
    return %arg0, %arg1, %c0_i32 : i32, i32, i32
  }
}

</mosaic_0001>

<llo_original>
// kernel: tpu_custom_call.1
$region0: #{tpu_custom_call.1}
  #allocation0 [shape = 'u32[]', space=smem, size = 0x4, offset = 0x4, fixed_abs, tag = 'smem constant byte address 0x4 - core index']
  #allocation1 [shape = 'u32[144,128]{1,0:T(1,128)}', space=vmem, size = 0x12000, scoped, tag = 'internal scratch']
  #allocation2 [shape = 'f32[4,8,8]{2,1,0:T(8,128)}', space=vmem, size = 0x4000, scoped, tag = 'scratch operand']
  #allocation3 [shape = 'f32[4,8,1]{2,1,0:T(8,128)}', space=vmem, size = 0x4000, scoped, tag = 'scratch operand']
  #allocation4 [shape = 'f32[4,8,1]{2,1,0:T(8,128)}', space=vmem, size = 0x4000, scoped, tag = 'scratch operand']
  #allocation5 [shape = 'f32[4,8,8]{2,1,0:T(8,128)}', space=vmem, size = 0x4000, scoped, tag = 'scratch operand']
  %s0 = inlined_call_operand.hbm [shape: f32[2,16,32], index: 0, kind: input, shape index: {}]
  %s1 = inlined_call_operand.hbm [shape: f32[2,16,32], index: 1, kind: input, shape index: {}]
  %s2 = inlined_call_operand.hbm [shape: f32[2,16,32], index: 2, kind: input, shape index: {}]
  %s3 = inlined_call_operand.hbm [shape: f32[32,32], index: 3, kind: input, shape index: {}]
  %s4 = inlined_call_operand.vmem [shape: f32[1,32], index: 4, kind: input, shape index: {}]
  %s5 = inlined_call_operand.hbm [shape: f32[32,32], index: 5, kind: input, shape index: {}]
  %s6 = inlined_call_operand.vmem [shape: f32[1,32], index: 6, kind: input, shape index: {}]
  %s7 = inlined_call_operand.hbm [shape: f32[32,32], index: 7, kind: input, shape index: {}]
  %s8 = inlined_call_operand.hbm [shape: f32[1,32], index: 8, kind: input, shape index: {}]
  %s9 = inlined_call_operand.vmem [shape: f32[32,32], index: 9, kind: input, shape index: {}]
  %s10 = inlined_call_operand.vmem [shape: f32[1,32], index: 10, kind: input, shape index: {}]
  %s11 = inlined_call_operand.vmem [shape: f32[1,32], index: 11, kind: input, shape index: {}]
  %s12 = inlined_call_operand.vmem [shape: f32[1,32], index: 12, kind: input, shape index: {}]
  %s13 = inlined_call_operand.hbm [shape: f32[2,16,32], index: 13, kind: output, shape index: {}]
  %s14 = sld [smem:[#allocation0]]
  $region121: #{tpu_custom_call.1} parent=0
    _
  %s16 = ssub.s32 1, %s14
  %s17 = scalar_select 0, %s16, %s14
  $region1: #{tpu_custom_call.1} parent=0
    #allocation6 [shape = 'u8[8192]{0}', space=vmem, size = 0x2000, scoped, tag = 'input window, operand 0']
    #allocation7 [shape = 's32[2]{0}', space=sflag, size = 0x8, scoped, tag = 'scoped memory for tpu_custom_call.1']
    #allocation8 [shape = 's32[2]{0}', space=sflag, size = 0x8, scoped, tag = 'scoped memory for tpu_custom_call.1']
    #allocation9 [shape = 'u8[8192]{0}', space=vmem, size = 0x2000, scoped, tag = 'input window, operand 1']
    #allocation10 [shape = 's32[2]{0}', space=sflag, size = 0x8, scoped, tag = 'scoped memory for tpu_custom_call.1']
    #allocation11 [shape = 'u8[8192]{0}', space=vmem, size = 0x2000, scoped, tag = 'input window, operand 2']
    #allocation12 [shape = 'u8[16384]{0}', space=vmem, size = 0x4000, scoped, tag = 'input window, operand 3, single buffered']
    #allocation13 [shape = 's32[1]{0}', space=sflag, size = 0x4, scoped, tag = 'scoped memory for tpu_custom_call.1']
    #allocation14 [shape = 'u8[16384]{0}', space=vmem, size = 0x4000, scoped, tag = 'input window, operand 5, single buffered']
    #allocation15 [shape = 'u8[16384]{0}', space=vmem, size = 0x4000, scoped, tag = 'input window, operand 7, single buffered']
    #allocation16 [shape = 's32[1]{0}', space=sflag, size = 0x4, scoped, tag = 'scoped memory for tpu_custom_call.1']
    #allocation17 [shape = 'u8[512]{0}', space=vmem, size = 0x400, scoped, tag = 'input window, operand 8, single buffered']
    #allocation18 [shape = 'u8[8192]{0}', space=vmem, size = 0x2000, scoped, tag = 'output window, operand 0']
    %18 = vsyncpa [#allocation7], 0
    %s19 = scalar_lea.sflag [#allocation7], 1
    %20 = vsyncpa %s19, 0
    %21 = vsyncpa [#allocation10], 0
    %s22 = scalar_lea.sflag [#allocation10], 1
    %23 = vsyncpa %s22, 0
    %24 = vsyncpa [#allocation13], 0
    %25 = vsyncpa [#allocation16], 0
    %26 = vsyncpa [#allocation8], 0
    %s27 = scalar_lea.sflag [#allocation8], 1
    %28 = vsyncpa %s27, 0
    loop: start=0, step=1, limit=10
    $region2: #{tpu_custom_call.1} parent=1 // loop_pre_header
      _
    $region3: #{tpu_custom_call.1} parent=1 // loop_header
      %s30 = sphi 0, %s34
      %p31 = scmp.ge.s32.totalorder %s30, 10
      %s37 = sphi 0, %s56
      %s38 = sphi 0, %s52
      %s39 = sphi 0, %s48
      %s40 = sphi 0, %s37
      %s41 = sphi 0, %s38
      %s42 = sphi 0, %s39
      %s43 = sphi 0, %s40
      %s44 = sphi 0, %s41
      %s45 = sphi 0, %s42
      %s61 = sphi 0, %s63
      %s64 = sphi 0, %s61
      %s65 = sphi 0, %s64
      %s81 = sphi 0, %s65
      %s89 = sphi 0, %s91
      %s92 = sphi 0, %s89
      %s93 = sphi 0, %s92
      %s109 = sphi 0, %s93
      %s117 = sphi 0, %s119
      %s120 = sphi 0, %s117
      %s121 = sphi 0, %s120
      %s137 = sphi 0, %s121
      %s141 = sphi 0, %s141
      %s143 = sphi 0, %s141
      %s144 = sphi 0, %s143
      %s158 = sphi 0, %s144
      %s162 = sphi 0, %s162
      %s164 = sphi 0, %s162
      %s165 = sphi 0, %s164
      %s179 = sphi 0, %s165
      %s183 = sphi 0, %s183
      %s185 = sphi 0, %s183
      %s186 = sphi 0, %s185
      %s200 = sphi 0, %s186
      %s204 = sphi 0, %s204
      %s206 = sphi 0, %s204
      %s207 = sphi 0, %s206
      %s221 = sphi 0, %s207
      %s225 = sphi 0, %s225
      %s227 = sphi 0, %s225
      %s228 = sphi 0, %s227
      %s242 = sphi 0, %s228
      %s246 = sphi 0, %s246
      %s248 = sphi 0, %s246
      %s249 = sphi 0, %s248
      %s263 = sphi 0, %s249
      %s267 = sphi 0, %s267
      %s269 = sphi 0, %s267
      %s270 = sphi 0, %s269
      %s284 = sphi 0, %s270
      %s288 = sphi 0, %s288
      %s290 = sphi 0, %s288
      %s291 = sphi 0, %s290
      %s305 = sphi 0, %s291
      %s309 = sphi 0, %s309
      %s311 = sphi 0, %s309
      %s312 = sphi 0, %s311
      %s326 = sphi 0, %s312
      %s330 = sphi 0, %s330
      %s332 = sphi 0, %s330
      %s333 = sphi 0, %s332
      %s347 = sphi 0, %s333
      %s355 = sphi 0, %s357
      %s358 = sphi 0, %s355
      %s359 = sphi 0, %s358
      %s375 = sphi 0, %s359
    $region4: #{tpu_custom_call.1} parent=1 // loop_header_branch
      %33 = sbr.rel (%p31) target = $region8
    $region5: #{tpu_custom_call.1} parent=1 // loop_body
      %s35 = ssub.s32 %s30, 1
      %s36 = ssub.s32 %s30, 2
      %s46 = sadd.s32 1, %s39
      %p47 = scmp.ge.s32.totalorder %s46, 2
      %s48 = scalar_select %p47, 0, %s46
      %s49 = sadd.s32 1, %s38
      %s50 = scalar_select %p47, %s49, %s38
      %p51 = scmp.ge.s32.totalorder %s50, 2
      %s52 = scalar_select %p51, 0, %s50
      %s53 = sadd.s32 1, %s37
      %s54 = scalar_select %p51, %s53, %s37
      %p55 = scmp.ge.s32.totalorder %s54, 2
      %s56 = scalar_select %p55, 0, %s54
      %s57 = ssub.s32 %s37, %s56
      %s58 = ssub.s32 %s38, %s52
      %s59 = sor.u32 %s57, %s58
      %p60 = scmp.eq.s32.totalorder %s59, 0
      %s62 = sadd.s32 %s61, 1
      %s63 = scalar_select %p60, %s61, %s62
      %p66 = pneg %p60
      %p67 = scmp.eq.s32.totalorder %s30, 7
      %p68 = por %p66, %p67
      %p69 = scmp.ne.s32.totalorder %s61, %s64
      %p70 = scmp.eq.s32.totalorder %s30, 0
      %p71 = por %p69, %p70
      %p72 = scmp.ne.s32.totalorder %s61, %s64
      %p73 = scmp.eq.s32.totalorder %s35, 7
      %p74 = por %p72, %p73
      %p75 = scmp.ne.s32.totalorder %s64, %s65
      %p76 = scmp.eq.s32.totalorder %s35, 0
      %p77 = por %p75, %p76
      %p78 = scmp.ne.s32.totalorder %s64, %s65
      %p79 = scmp.eq.s32.totalorder %s36, 7
      %p80 = por %p78, %p79
      %p82 = scmp.ne.s32.totalorder %s65, %s81
      %p83 = scmp.eq.s32.totalorder %s36, 0
      %p84 = por %p82, %p83
      %s85 = ssub.s32 %s37, %s56
      %s86 = ssub.s32 %s39, %s48
      %s87 = sor.u32 %s85, %s86
      %p88 = scmp.eq.s32.totalorder %s87, 0
      %s90 = sadd.s32 %s89, 1
      %s91 = scalar_select %p88, %s89, %s90
      %p94 = pneg %p88
      %p95 = scmp.eq.s32.totalorder %s30, 7
      %p96 = por %p94, %p95
      %p97 = scmp.ne.s32.totalorder %s89, %s92
      %p98 = scmp.eq.s32.totalorder %s30, 0
      %p99 = por %p97, %p98
      %p100 = scmp.ne.s32.totalorder %s89, %s92
      %p101 = scmp.eq.s32.totalorder %s35, 7
      %p102 = por %p100, %p101
      %p103 = scmp.ne.s32.totalorder %s92, %s93
      %p104 = scmp.eq.s32.totalorder %s35, 0
      %p105 = por %p103, %p104
      %p106 = scmp.ne.s32.totalorder %s92, %s93
      %p107 = scmp.eq.s32.totalorder %s36, 7
      %p108 = por %p106, %p107
      %p110 = scmp.ne.s32.totalorder %s93, %s109
      %p111 = scmp.eq.s32.totalorder %s36, 0
      %p112 = por %p110, %p111
      %s113 = ssub.s32 %s37, %s56
      %s114 = ssub.s32 %s39, %s48
      %s115 = sor.u32 %s113, %s114
      %p116 = scmp.eq.s32.totalorder %s115, 0
      %s118 = sadd.s32 %s117, 1
      %s119 = scalar_select %p116, %s117, %s118
      %p122 = pneg %p116
      %p123 = scmp.eq.s32.totalorder %s30, 7
      %p124 = por %p122, %p123
      %p125 = scmp.ne.s32.totalorder %s117, %s120
      %p126 = scmp.eq.s32.totalorder %s30, 0
      %p127 = por %p125, %p126
      %p128 = scmp.ne.s32.totalorder %s117, %s120
      %p129 = scmp.eq.s32.totalorder %s35, 7
      %p130 = por %p128, %p129
      %p131 = scmp.ne.s32.totalorder %s120, %s121
      %p132 = scmp.eq.s32.totalorder %s35, 0
      %p133 = por %p131, %p132
      %p134 = scmp.ne.s32.totalorder %s120, %s121
      %p135 = scmp.eq.s32.totalorder %s36, 7
      %p136 = por %p134, %p135
      %p138 = scmp.ne.s32.totalorder %s121, %s137
      %p139 = scmp.eq.s32.totalorder %s36, 0
      %p140 = por %p138, %p139
      %s142 = sadd.s32 %s141, 1
      %p145 = scmp.eq.s32.totalorder %s30, 7
      %p146 = scmp.ne.s32.totalorder %s141, %s143
      %p147 = scmp.eq.s32.totalorder %s30, 0
      %p148 = por %p146, %p147
      %p149 = scmp.ne.s32.totalorder %s141, %s143
      %p150 = scmp.eq.s32.totalorder %s35, 7
      %p151 = por %p149, %p150
      %p152 = scmp.ne.s32.totalorder %s143, %s144
      %p153 = scmp.eq.s32.totalorder %s35, 0
      %p154 = por %p152, %p153
      %p155 = scmp.ne.s32.totalorder %s143, %s144
      %p156 = scmp.eq.s32.totalorder %s36, 7
      %p157 = por %p155, %p156
      %p159 = scmp.ne.s32.totalorder %s144, %s158
      %p160 = scmp.eq.s32.totalorder %s36, 0
      %p161 = por %p159, %p160
      %s163 = sadd.s32 %s162, 1
      %p166 = scmp.eq.s32.totalorder %s30, 7
      %p167 = scmp.ne.s32.totalorder %s162, %s164
      %p168 = scmp.eq.s32.totalorder %s30, 0
      %p169 = por %p167, %p168
      %p170 = scmp.ne.s32.totalorder %s162, %s164
      %p171 = scmp.eq.s32.totalorder %s35, 7
      %p172 = por %p170, %p171
      %p173 = scmp.ne.s32.totalorder %s164, %s165
      %p174 = scmp.eq.s32.totalorder %s35, 0
      %p175 = por %p173, %p174
      %p176 = scmp.ne.s32.totalorder %s164, %s165
      %p177 = scmp.eq.s32.totalorder %s36, 7
      %p178 = por %p176, %p177
      %p180 = scmp.ne.s32.totalorder %s165, %s179
      %p181 = scmp.eq.s32.totalorder %s36, 0
      %p182 = por %p180, %p181
      %s184 = sadd.s32 %s183, 1
      %p187 = scmp.eq.s32.totalorder %s30, 7
      %p188 = scmp.ne.s32.totalorder %s183, %s185
      %p189 = scmp.eq.s32.totalorder %s30, 0
      %p190 = por %p188, %p189
      %p191 = scmp.ne.s32.totalorder %s183, %s185
      %p192 = scmp.eq.s32.totalorder %s35, 7
      %p193 = por %p191, %p192
      %p194 = scmp.ne.s32.totalorder %s185, %s186
      %p195 = scmp.eq.s32.totalorder %s35, 0
      %p196 = por %p194, %p195
      %p197 = scmp.ne.s32.totalorder %s185, %s186
      %p198 = scmp.eq.s32.totalorder %s36, 7
      %p199 = por %p197, %p198
      %p201 = scmp.ne.s32.totalorder %s186, %s200
      %p202 = scmp.eq.s32.totalorder %s36, 0
      %p203 = por %p201, %p202
      %s205 = sadd.s32 %s204, 1
      %p208 = scmp.eq.s32.totalorder %s30, 7
      %p209 = scmp.ne.s32.totalorder %s204, %s206
      %p210 = scmp.eq.s32.totalorder %s30, 0
      %p211 = por %p209, %p210
      %p212 = scmp.ne.s32.totalorder %s204, %s206
      %p213 = scmp.eq.s32.totalorder %s35, 7
      %p214 = por %p212, %p213
      %p215 = scmp.ne.s32.totalorder %s206, %s207
      %p216 = scmp.eq.s32.totalorder %s35, 0
      %p217 = por %p215, %p216
      %p218 = scmp.ne.s32.totalorder %s206, %s207
      %p219 = scmp.eq.s32.totalorder %s36, 7
      %p220 = por %p218, %p219
      %p222 = scmp.ne.s32.totalorder %s207, %s221
      %p223 = scmp.eq.s32.totalorder %s36, 0
      %p224 = por %p222, %p223
      %s226 = sadd.s32 %s225, 1
      %p229 = scmp.eq.s32.totalorder %s30, 7
      %p230 = scmp.ne.s32.totalorder %s225, %s227
      %p231 = scmp.eq.s32.totalorder %s30, 0
      %p232 = por %p230, %p231
      %p233 = scmp.ne.s32.totalorder %s225, %s227
      %p234 = scmp.eq.s32.totalorder %s35, 7
      %p235 = por %p233, %p234
      %p236 = scmp.ne.s32.totalorder %s227, %s228
      %p237 = scmp.eq.s32.totalorder %s35, 0
      %p238 = por %p236, %p237
      %p239 = scmp.ne.s32.totalorder %s227, %s228
      %p240 = scmp.eq.s32.totalorder %s36, 7
      %p241 = por %p239, %p240
      %p243 = scmp.ne.s32.totalorder %s228, %s242
      %p244 = scmp.eq.s32.totalorder %s36, 0
      %p245 = por %p243, %p244
      %s247 = sadd.s32 %s246, 1
      %p250 = scmp.eq.s32.totalorder %s30, 7
      %p251 = scmp.ne.s32.totalorder %s246, %s248
      %p252 = scmp.eq.s32.totalorder %s30, 0
      %p253 = por %p251, %p252
      %p254 = scmp.ne.s32.totalorder %s246, %s248
      %p255 = scmp.eq.s32.totalorder %s35, 7
      %p256 = por %p254, %p255
      %p257 = scmp.ne.s32.totalorder %s248, %s249
      %p258 = scmp.eq.s32.totalorder %s35, 0
      %p259 = por %p257, %p258
      %p260 = scmp.ne.s32.totalorder %s248, %s249
      %p261 = scmp.eq.s32.totalorder %s36, 7
      %p262 = por %p260, %p261
      %p264 = scmp.ne.s32.totalorder %s249, %s263
      %p265 = scmp.eq.s32.totalorder %s36, 0
      %p266 = por %p264, %p265
      %s268 = sadd.s32 %s267, 1
      %p271 = scmp.eq.s32.totalorder %s30, 7
      %p272 = scmp.ne.s32.totalorder %s267, %s269
      %p273 = scmp.eq.s32.totalorder %s30, 0
      %p274 = por %p272, %p273
      %p275 = scmp.ne.s32.totalorder %s267, %s269
      %p276 = scmp.eq.s32.totalorder %s35, 7
      %p277 = por %p275, %p276
      %p278 = scmp.ne.s32.totalorder %s269, %s270
      %p279 = scmp.eq.s32.totalorder %s35, 0
      %p280 = por %p278, %p279
      %p281 = scmp.ne.s32.totalorder %s269, %s270
      %p282 = scmp.eq.s32.totalorder %s36, 7
      %p283 = por %p281, %p282
      %p285 = scmp.ne.s32.totalorder %s270, %s284
      %p286 = scmp.eq.s32.totalorder %s36, 0
      %p287 = por %p285, %p286
      %s289 = sadd.s32 %s288, 1
      %p292 = scmp.eq.s32.totalorder %s30, 7
      %p293 = scmp.ne.s32.totalorder %s288, %s290
      %p294 = scmp.eq.s32.totalorder %s30, 0
      %p295 = por %p293, %p294
      %p296 = scmp.ne.s32.totalorder %s288, %s290
      %p297 = scmp.eq.s32.totalorder %s35, 7
      %p298 = por %p296, %p297
      %p299 = scmp.ne.s32.totalorder %s290, %s291
      %p300 = scmp.eq.s32.totalorder %s35, 0
      %p301 = por %p299, %p300
      %p302 = scmp.ne.s32.totalorder %s290, %s291
      %p303 = scmp.eq.s32.totalorder %s36, 7
      %p304 = por %p302, %p303
      %p306 = scmp.ne.s32.totalorder %s291, %s305
      %p307 = scmp.eq.s32.totalorder %s36, 0
      %p308 = por %p306, %p307
      %s310 = sadd.s32 %s309, 1
      %p313 = scmp.eq.s32.totalorder %s30, 7
      %p314 = scmp.ne.s32.totalorder %s309, %s311
      %p315 = scmp.eq.s32.totalorder %s30, 0
      %p316 = por %p314, %p315
      %p317 = scmp.ne.s32.totalorder %s309, %s311
      %p318 = scmp.eq.s32.totalorder %s35, 7
      %p319 = por %p317, %p318
      %p320 = scmp.ne.s32.totalorder %s311, %s312
      %p321 = scmp.eq.s32.totalorder %s35, 0
      %p322 = por %p320, %p321
      %p323 = scmp.ne.s32.totalorder %s311, %s312
      %p324 = scmp.eq.s32.totalorder %s36, 7
      %p325 = por %p323, %p324
      %p327 = scmp.ne.s32.totalorder %s312, %s326
      %p328 = scmp.eq.s32.totalorder %s36, 0
      %p329 = por %p327, %p328
      %s331 = sadd.s32 %s330, 1
      %p334 = scmp.eq.s32.totalorder %s30, 7
      %p335 = scmp.ne.s32.totalorder %s330, %s332
      %p336 = scmp.eq.s32.totalorder %s30, 0
      %p337 = por %p335, %p336
      %p338 = scmp.ne.s32.totalorder %s330, %s332
      %p339 = scmp.eq.s32.totalorder %s35, 7
      %p340 = por %p338, %p339
      %p341 = scmp.ne.s32.totalorder %s332, %s333
      %p342 = scmp.eq.s32.totalorder %s35, 0
      %p343 = por %p341, %p342
      %p344 = scmp.ne.s32.totalorder %s332, %s333
      %p345 = scmp.eq.s32.totalorder %s36, 7
      %p346 = por %p344, %p345
      %p348 = scmp.ne.s32.totalorder %s333, %s347
      %p349 = scmp.eq.s32.totalorder %s36, 0
      %p350 = por %p348, %p349
      %s351 = ssub.s32 %s37, %s56
      %s352 = ssub.s32 %s38, %s52
      %s353 = sor.u32 %s351, %s352
      %p354 = scmp.eq.s32.totalorder %s353, 0
      %s356 = sadd.s32 %s355, 1
      %s357 = scalar_select %p354, %s355, %s356
      %p360 = pneg %p354
      %p361 = scmp.eq.s32.totalorder %s30, 7
      %p362 = por %p360, %p361
      %p363 = scmp.ne.s32.totalorder %s355, %s358
      %p364 = scmp.eq.s32.totalorder %s30, 0
      %p365 = por %p363, %p364
      %p366 = scmp.ne.s32.totalorder %s355, %s358
      %p367 = scmp.eq.s32.totalorder %s35, 7
      %p368 = por %p366, %p367
      %p369 = scmp.ne.s32.totalorder %s358, %s359
      %p370 = scmp.eq.s32.totalorder %s35, 0
      %p371 = por %p369, %p370
      %p372 = scmp.ne.s32.totalorder %s358, %s359
      %p373 = scmp.eq.s32.totalorder %s36, 7
      %p374 = por %p372, %p373
      %p376 = scmp.ne.s32.totalorder %s359, %s375
      %p377 = scmp.eq.s32.totalorder %s36, 0
      %p378 = por %p376, %p377
      %p379 = scmp.le.s32.totalorder 1, %s30
      %p380 = scmp.lt.s32.totalorder %s30, 9
      %p381 = pnand %p379, %p380
      %p382 = pneg %p381
      // Predicated region
      $region9: #{tpu_custom_call.1} parent=5 // pred_check
        _
      $region10: #{tpu_custom_call.1} parent=5 // pred_check_branch
        %384 = sbr.rel (%p381) target = $region12
      $region11: #{tpu_custom_call.1} parent=5 // pred_region
        %s385 = ssub.s32 %s30, 1
        // Predicated region
        $region13: #{tpu_custom_call.1} parent=11 // pred_check
          %p386 = pneg %p154
        $region14: #{tpu_custom_call.1} parent=11 // pred_check_branch
          %388 = sbr.rel (%p386) target = $region16
        $region15: #{tpu_custom_call.1} parent=11 // pred_region
          %s390 = ssub.s32 512, 512
          %391 = vsyncadd [#allocation13], %s390
          %s392 = sshll.u32 [#allocation12], 4
          %s393 = int_to_ptr.vmem [resolvable:$true] %s392
          %398 = dma.hbm_to_vmem [thread:$0]  %s3, 512, %s393, [#allocation13], 128, 128, 8
        $region16: #{tpu_custom_call.1} parent=11 // pred_fallthru
          _
        // Predicated region
        $region17: #{tpu_custom_call.1} parent=11 // pred_check
          %p399 = pneg %p175
        $region18: #{tpu_custom_call.1} parent=11 // pred_check_branch
          %401 = sbr.rel (%p399) target = $region20
        $region19: #{tpu_custom_call.1} parent=11 // pred_region
          _
        $region20: #{tpu_custom_call.1} parent=11 // pred_fallthru
          _
        // Predicated region
        $region21: #{tpu_custom_call.1} parent=11 // pred_check
          %p402 = pneg %p196
        $region22: #{tpu_custom_call.1} parent=11 // pred_check_branch
          %404 = sbr.rel (%p402) target = $region24
        $region23: #{tpu_custom_call.1} parent=11 // pred_region
          %s406 = ssub.s32 512, 512
          %407 = vsyncadd [#allocation13], %s406
          %s408 = sshll.u32 [#allocation14], 4
          %s409 = int_to_ptr.vmem [resolvable:$true] %s408
          %414 = dma.hbm_to_vmem [thread:$0]  %s5, 512, %s409, [#allocation13], 128, 128, 8
        $region24: #{tpu_custom_call.1} parent=11 // pred_fallthru
          _
        // Predicated region
        $region25: #{tpu_custom_call.1} parent=11 // pred_check
          %p415 = pneg %p217
        $region26: #{tpu_custom_call.1} parent=11 // pred_check_branch
          %417 = sbr.rel (%p415) target = $region28
        $region27: #{tpu_custom_call.1} parent=11 // pred_region
          _
        $region28: #{tpu_custom_call.1} parent=11 // pred_fallthru
          _
        // Predicated region
        $region29: #{tpu_custom_call.1} parent=11 // pred_check
          %p418 = pneg %p238
        $region30: #{tpu_custom_call.1} parent=11 // pred_check_branch
          %420 = sbr.rel (%p418) target = $region32
        $region31: #{tpu_custom_call.1} parent=11 // pred_region
          %s422 = ssub.s32 512, 512
          %423 = vsyncadd [#allocation16], %s422
          %s424 = sshll.u32 [#allocation15], 4
          %s425 = int_to_ptr.vmem [resolvable:$true] %s424
          %430 = dma.hbm_to_vmem [thread:$0]  %s7, 512, %s425, [#allocation16], 128, 128, 8
        $region32: #{tpu_custom_call.1} parent=11 // pred_fallthru
          _
        // Predicated region
        $region33: #{tpu_custom_call.1} parent=11 // pred_check
          %p431 = pneg %p259
        $region34: #{tpu_custom_call.1} parent=11 // pred_check_branch
          %433 = sbr.rel (%p431) target = $region36
        $region35: #{tpu_custom_call.1} parent=11 // pred_region
          %s435 = ssub.s32 16, 16
          %436 = vsyncadd [#allocation16], %s435
          %s438 = sshll.u32 [#allocation17], 4
          %s439 = int_to_ptr.vmem [resolvable:$true] %s438
          %441 = dma.hbm_to_vmem [thread:$0]  %s8, 16, %s439, [#allocation16]
        $region36: #{tpu_custom_call.1} parent=11 // pred_fallthru
          _
        // Predicated region
        $region37: #{tpu_custom_call.1} parent=11 // pred_check
          %p442 = pneg %p280
        $region38: #{tpu_custom_call.1} parent=11 // pred_check_branch
          %444 = sbr.rel (%p442) target = $region40
        $region39: #{tpu_custom_call.1} parent=11 // pred_region
          _
        $region40: #{tpu_custom_call.1} parent=11 // pred_fallthru
          _
        // Predicated region
        $region41: #{tpu_custom_call.1} parent=11 // pred_check
          %p445 = pneg %p301
        $region42: #{tpu_custom_call.1} parent=11 // pred_check_branch
          %447 = sbr.rel (%p445) target = $region44
        $region43: #{tpu_custom_call.1} parent=11 // pred_region
          _
        $region44: #{tpu_custom_call.1} parent=11 // pred_fallthru
          _
        // Predicated region
        $region45: #{tpu_custom_call.1} parent=11 // pred_check
          %p448 = pneg %p322
        $region46: #{tpu_custom_call.1} parent=11 // pred_check_branch
          %450 = sbr.rel (%p448) target = $region48
        $region47: #{tpu_custom_call.1} parent=11 // pred_region
          _
        $region48: #{tpu_custom_call.1} parent=11 // pred_fallthru
          _
        // Predicated region
        $region49: #{tpu_custom_call.1} parent=11 // pred_check
          %p451 = pneg %p343
        $region50: #{tpu_custom_call.1} parent=11 // pred_check_branch
          %453 = sbr.rel (%p451) target = $region52
        $region51: #{tpu_custom_call.1} parent=11 // pred_region
          _
        $region52: #{tpu_custom_call.1} parent=11 // pred_fallthru
          _
      $region12: #{tpu_custom_call.1} parent=5 // pred_fallthru
        _
      %p454 = scmp.lt.s32.totalorder %s30, 8
      // Predicated region
      $region53: #{tpu_custom_call.1} parent=5 // pred_check
        %p455 = pneg %p454
      $region54: #{tpu_custom_call.1} parent=5 // pred_check_branch
        %457 = sbr.rel (%p455) target = $region56
      $region55: #{tpu_custom_call.1} parent=5 // pred_region
        // Predicated region
        $region57: #{tpu_custom_call.1} parent=55 // pred_check
          %p458 = pneg %p71
        $region58: #{tpu_custom_call.1} parent=55 // pred_check_branch
          %460 = sbr.rel (%p458) target = $region60
        $region59: #{tpu_custom_call.1} parent=55 // pred_region
          %s461 = sand.u32 %s61, 1
          %s462 = scalar_lea.sflag [#allocation7], %s461
          %s463 = sand.u32 %s61, 1
          %s464 = smul.addr %s463, 8
          %s465 = scalar_lea.vmem [#allocation6], %s464
          %s467 = ssub.s32 128, 128
          %468 = vsyncadd %s462, %s467
          %s469 = smul.addr %s37, 2
          %s470 = sadd.s32 %s38, %s469
          %s471 = smul.addr %s470, 128
          %s472 = scalar_lea.hbm %s0, %s471
          %s474 = sshll.u32 %s465, 4
          %s475 = int_to_ptr.vmem [resolvable:$true] %s474
          %477 = dma.hbm_to_vmem [thread:$0]  %s472, 128, %s475, %s462
        $region60: #{tpu_custom_call.1} parent=55 // pred_fallthru
          _
        // Predicated region
        $region61: #{tpu_custom_call.1} parent=55 // pred_check
          %p478 = pneg %p99
        $region62: #{tpu_custom_call.1} parent=55 // pred_check_branch
          %480 = sbr.rel (%p478) target = $region64
        $region63: #{tpu_custom_call.1} parent=55 // pred_region
          %s481 = sand.u32 %s30, 1
          %s482 = scalar_lea.sflag [#allocation10], %s481
          %s483 = sand.u32 %s89, 1
          %s484 = smul.addr %s483, 8
          %s485 = scalar_lea.vmem [#allocation9], %s484
          %s487 = ssub.s32 128, 128
          %488 = vsyncadd %s482, %s487
          %s489 = smul.addr %s37, 2
          %s490 = sadd.s32 %s39, %s489
          %s491 = smul.addr %s490, 128
          %s492 = scalar_lea.hbm %s1, %s491
          %s494 = sshll.u32 %s485, 4
          %s495 = int_to_ptr.vmem [resolvable:$true] %s494
          %497 = dma.hbm_to_vmem [thread:$0]  %s492, 128, %s495, %s482
        $region64: #{tpu_custom_call.1} parent=55 // pred_fallthru
          _
        // Predicated region
        $region65: #{tpu_custom_call.1} parent=55 // pred_check
          %p498 = pneg %p127
        $region66: #{tpu_custom_call.1} parent=55 // pred_check_branch
          %500 = sbr.rel (%p498) target = $region68
        $region67: #{tpu_custom_call.1} parent=55 // pred_region
          %s501 = sand.u32 %s30, 1
          %s502 = scalar_lea.sflag [#allocation10], %s501
          %s503 = sand.u32 %s117, 1
          %s504 = smul.addr %s503, 8
          %s505 = scalar_lea.vmem [#allocation11], %s504
          %s507 = ssub.s32 128, 128
          %508 = vsyncadd %s502, %s507
          %s509 = smul.addr %s37, 2
          %s510 = sadd.s32 %s39, %s509
          %s511 = smul.addr %s510, 128
          %s512 = scalar_lea.hbm %s2, %s511
          %s514 = sshll.u32 %s505, 4
          %s515 = int_to_ptr.vmem [resolvable:$true] %s514
          %517 = dma.hbm_to_vmem [thread:$0]  %s512, 128, %s515, %s502
        $region68: #{tpu_custom_call.1} parent=55 // pred_fallthru
          _
      $region56: #{tpu_custom_call.1} parent=5 // pred_fallthru
        _
      %p518 = scmp.le.s32.totalorder 1, %s30
      %p519 = scmp.lt.s32.totalorder %s30, 9
      %p520 = pnand %p518, %p519
      %p521 = pneg %p520
      // Predicated region
      $region69: #{tpu_custom_call.1} parent=5 // pred_check
        _
      $region70: #{tpu_custom_call.1} parent=5 // pred_check_branch
        %523 = sbr.rel (%p520) target = $region72
      $region71: #{tpu_custom_call.1} parent=5 // pred_region
        %s524 = ssub.s32 %s30, 1
        %s525 = sand.u32 %s64, 1
        %s526 = scalar_lea.sflag [#allocation7], %s525
        %s527 = sand.u32 %s64, 1
        %s528 = smul.addr %s527, 8
        %s529 = scalar_lea.vmem [#allocation6], %s528
        // Predicated region
        $region73: #{tpu_custom_call.1} parent=71 // pred_check
          %p530 = pneg %p77
        $region74: #{tpu_custom_call.1} parent=71 // pred_check_branch
          %532 = sbr.rel (%p530) target = $region76
        $region75: #{tpu_custom_call.1} parent=71 // pred_region
          %533 = dma.done %s526, 128
        $region76: #{tpu_custom_call.1} parent=71 // pred_fallthru
          _
        %s534 = sand.u32 %s35, 1
        %s535 = scalar_lea.sflag [#allocation10], %s534
        %s536 = sand.u32 %s92, 1
        %s537 = smul.addr %s536, 8
        %s538 = scalar_lea.vmem [#allocation9], %s537
        // Predicated region
        $region77: #{tpu_custom_call.1} parent=71 // pred_check
          %p539 = pneg %p105
        $region78: #{tpu_custom_call.1} parent=71 // pred_check_branch
          %541 = sbr.rel (%p539) target = $region80
        $region79: #{tpu_custom_call.1} parent=71 // pred_region
          %542 = dma.done %s535, 128
        $region80: #{tpu_custom_call.1} parent=71 // pred_fallthru
          _
        %s543 = sand.u32 %s35, 1
        %s544 = scalar_lea.sflag [#allocation10], %s543
        %s545 = sand.u32 %s120, 1
        %s546 = smul.addr %s545, 8
        %s547 = scalar_lea.vmem [#allocation11], %s546
        // Predicated region
        $region81: #{tpu_custom_call.1} parent=71 // pred_check
          %p548 = pneg %p133
        $region82: #{tpu_custom_call.1} parent=71 // pred_check_branch
          %550 = sbr.rel (%p548) target = $region84
        $region83: #{tpu_custom_call.1} parent=71 // pred_region
          %551 = dma.done %s544, 128
        $region84: #{tpu_custom_call.1} parent=71 // pred_fallthru
          _
        // Predicated region
        $region85: #{tpu_custom_call.1} parent=71 // pred_check
          %p552 = pneg %p154
        $region86: #{tpu_custom_call.1} parent=71 // pred_check_branch
          %554 = sbr.rel (%p552) target = $region88
        $region87: #{tpu_custom_call.1} parent=71 // pred_region
          %555 = dma.done [#allocation13], 512
        $region88: #{tpu_custom_call.1} parent=71 // pred_fallthru
          _
        // Predicated region
        $region89: #{tpu_custom_call.1} parent=71 // pred_check
          %p556 = pneg %p196
        $region90: #{tpu_custom_call.1} parent=71 // pred_check_branch
          %558 = sbr.rel (%p556) target = $region92
        $region91: #{tpu_custom_call.1} parent=71 // pred_region
          %559 = dma.done [#allocation13], 512
        $region92: #{tpu_custom_call.1} parent=71 // pred_fallthru
          _
        // Predicated region
        $region93: #{tpu_custom_call.1} parent=71 // pred_check
          %p560 = pneg %p238
        $region94: #{tpu_custom_call.1} parent=71 // pred_check_branch
          %562 = sbr.rel (%p560) target = $region96
        $region95: #{tpu_custom_call.1} parent=71 // pred_region
          %563 = dma.done [#allocation16], 512
        $region96: #{tpu_custom_call.1} parent=71 // pred_fallthru
          _
        // Predicated region
        $region97: #{tpu_custom_call.1} parent=71 // pred_check
          %p564 = pneg %p259
        $region98: #{tpu_custom_call.1} parent=71 // pred_check_branch
          %566 = sbr.rel (%p564) target = $region100
        $region99: #{tpu_custom_call.1} parent=71 // pred_region
          %567 = dma.done [#allocation16], 16
        $region100: #{tpu_custom_call.1} parent=71 // pred_fallthru
          _
        %s568 = sand.u32 %s64, 1
        %s569 = scalar_lea.sflag [#allocation7], %s568
        %s570 = sand.u32 %s64, 1
        %s571 = smul.addr %s570, 8
        %s572 = scalar_lea.vmem [#allocation6], %s571
        %p573 = pneg %p77
        %p574 = pneg %p74
        %s575 = sand.u32 %s35, 1
        %s576 = scalar_lea.sflag [#allocation10], %s575
        %s577 = sand.u32 %s92, 1
        %s578 = smul.addr %s577, 8
        %s579 = scalar_lea.vmem [#allocation9], %s578
        %p580 = pneg %p105
        %p581 = pneg %p102
        %s582 = sand.u32 %s35, 1
        %s583 = scalar_lea.sflag [#allocation10], %s582
        %s584 = sand.u32 %s120, 1
        %s585 = smul.addr %s584, 8
        %s586 = scalar_lea.vmem [#allocation11], %s585
        %p587 = pneg %p133
        %p588 = pneg %p130
        %p589 = pneg %p154
        %p590 = pneg %p151
        %p591 = pneg %p175
        %p592 = pneg %p172
        %p593 = pneg %p196
        %p594 = pneg %p193
        %p595 = pneg %p217
        %p596 = pneg %p214
        %p597 = pneg %p238
        %p598 = pneg %p235
        %p599 = pneg %p259
        %p600 = pneg %p256
        %p601 = pneg %p280
        %p602 = pneg %p277
        %p603 = pneg %p301
        %p604 = pneg %p298
        %p605 = pneg %p322
        %p606 = pneg %p319
        %p607 = pneg %p343
        %p608 = pneg %p340
        %p609 = pneg %p371
        %p610 = pneg %p368
        %s611 = sand.u32 %s358, 1
        %s612 = scalar_lea.sflag [#allocation8], %s611
        %s613 = sand.u32 %s358, 1
        %s614 = smul.addr %s613, 8
        %s615 = scalar_lea.vmem [#allocation18], %s614
        %v616 = vld [vmem:[%s529] sm:$0xff]
        %p617 = scmp.eq.s32.totalorder %s42, 0
        // Predicated region
        $region101: #{tpu_custom_call.1} parent=71 // pred_check
          %p618 = pneg %p617
        $region102: #{tpu_custom_call.1} parent=71 // pred_check_branch
          %620 = sbr.rel (%p618) target = $region104
        $region103: #{tpu_custom_call.1} parent=71 // pred_region
          %v621 = vld [vmem:[#allocation12] sm:$0xff]
          %v622 = vld [vmem:[#allocation12 + $0x8] sm:$0xff]
          %v623 = vld [vmem:[#allocation12 + $0x10] sm:$0xff]
          %v624 = vld [vmem:[#allocation12 + $0x18] sm:$0xff]
          %v625 = vld [vmem:[%s4] sm:$0x1]
          %v627 = vlaneseq
          %v628 = vshrl.u32 %v627, 7
          %v629 = vsub.s32 0, %v628
          %v630 = vrot.slane %v625, %v629
          %vm632 = vcmask 261120
          %v634 = vsel %vm632, %v616, 0
          %636 = vmatprep.subr.mxu0 0.0
          %637 = vmatpush1.msra.mxu0 %v621
          %638 = vmatprep.subr.mxu0 0.0
          %639 = vmatpush1.msra.mxu0 %v622
          %640 = vmatprep.subr.mxu0 0.0
          %641 = vmatpush1.msra.mxu0 %v623
          %642 = vmatprep.subr.mxu0 0.0
          %643 = vmatpush1.msra.mxu0 %v624
          %644 = vmatprep.subr.mxu0 0.0
          %645 = vmatpush1.msra.mxu0 0.0
          %646 = vmatprep.subr.mxu0 0.0
          %647 = vmatpush1.msra.mxu0 0.0
          %648 = vmatprep.subr.mxu0 0.0
          %649 = vmatpush1.msra.mxu0 0.0
          %650 = vmatprep.subr.mxu0 0.0
          %651 = vmatpush1.msra.mxu0 0.0
          %652 = vmatprep.subr.mxu0 0.0
          %653 = vmatpush1.msra.mxu0 0.0
          %654 = vmatprep.subr.mxu0 0.0
          %655 = vmatpush1.msra.mxu0 0.0
          %656 = vmatprep.subr.mxu0 0.0
          %657 = vmatpush1.msra.mxu0 0.0
          %658 = vmatprep.subr.mxu0 0.0
          %659 = vmatpush1.msra.mxu0 0.0
          %660 = vmatprep.subr.mxu0 0.0
          %661 = vmatpush1.msra.mxu0 0.0
          %662 = vmatprep.subr.mxu0 0.0
          %663 = vmatpush1.msra.mxu0 0.0
          %664 = vmatprep.subr.mxu0 0.0
          %665 = vmatpush1.msra.mxu0 0.0
          %666 = vmatprep.subr.mxu0 0.0
          %667 = vmatpush1.msra.mxu0 0.0
          %668 = vmatprep.subr.mxu0 0.0
          %669 = vmatpush1.msra.mxu0 0.0
          %670 = vmatprep.subr.mxu0 0.0
          %671 = vmatpush1.msra.mxu0 0.0
          %672 = vmatprep.subr.mxu0 0.0
          %673 = vmatpush1.msra.mxu0 0.0
          %674 = vmatprep.subr.mxu0 0.0
          %675 = vmatpush1.msra.mxu0 0.0
          %676 = vmatprep.subr.mxu0 0.0
          %677 = vmatpush1.msra.mxu0 0.0
          %678 = vmatprep.subr.mxu0 0.0
          %679 = vmatpush1.msra.mxu0 0.0
          %680 = vmatprep.subr.mxu0 0.0
          %681 = vmatpush1.msra.mxu0 0.0
          %682 = vmatprep.subr.mxu0 0.0
          %683 = vmatpush1.msra.mxu0 0.0
          %684 = vmatprep.subr.mxu0 0.0
          %685 = vmatpush1.msra.mxu0 0.0
          %686 = vmatprep.subr.mxu0 0.0
          %687 = vmatpush1.msra.mxu0 0.0
          %688 = vmatprep.subr.mxu0 0.0
          %689 = vmatpush1.msra.mxu0 0.0
          %690 = vmatprep.subr.mxu0 0.0
          %691 = vmatpush1.msra.mxu0 0.0
          %692 = vmatprep.subr.mxu0 0.0
          %693 = vmatpush1.msra.mxu0 0.0
          %694 = vmatprep.subr.mxu0 0.0
          %695 = vmatpush1.msra.mxu0 0.0
          %696 = vmatprep.subr.mxu0 0.0
          %697 = vmatpush1.msra.mxu0 0.0
          %698 = vmatprep.subr.mxu0 0.0
          %699 = vmatpush1.msra.mxu0 0.0
          %700 = vmatprep.mubr.f32.mxu0 0.0
          %701 = vmatmul.mubr.f32.gmra.mrb[0].mxu0 %v634
          %v702 = vpop.f32.mrb[0].mxu0
          %v703 = vadd.f32 %v630, %v702
          %v704 = vpop.f32.mrb[0].mxu0
          %705 = vdwg.mxu0
          %707 = vrot.lane.b32.xlu0 %v703, 120
          %v708 = vpop.permute.xlu0 %707
          %710 = vrot.lane.b32.xlu0 %v703, 112
          %v711 = vpop.permute.xlu0 %710
          %713 = vrot.lane.b32.xlu0 %v703, 104
          %v714 = vpop.permute.xlu0 %713
          %vm716 = vcmask 64512
          %717 = vst.msk [vmem:[#allocation2] sm:$0xff] %vm716, %v703
          %718 = vst.msk [vmem:[#allocation2 + $0x8] sm:$0xff] %vm716, %v708
          %719 = vst.msk [vmem:[#allocation2 + $0x10] sm:$0xff] %vm716, %v711
          %720 = vst.msk [vmem:[#allocation2 + $0x18] sm:$0xff] %vm716, %v714
          %vm721 = vcmask 7168
          %722 = vst.msk [vmem:[#allocation3] sm:$0xff] %vm721, -inf
          %723 = vst.msk [vmem:[#allocation3 + $0x8] sm:$0xff] %vm721, -inf
          %724 = vst.msk [vmem:[#allocation3 + $0x10] sm:$0xff] %vm721, -inf
          %725 = vst.msk [vmem:[#allocation3 + $0x18] sm:$0xff] %vm721, -inf
          %726 = vst.msk [vmem:[#allocation4] sm:$0xff] %vm721, 0.0
          %727 = vst.msk [vmem:[#allocation4 + $0x8] sm:$0xff] %vm721, 0.0
          %728 = vst.msk [vmem:[#allocation4 + $0x10] sm:$0xff] %vm721, 0.0
          %729 = vst.msk [vmem:[#allocation4 + $0x18] sm:$0xff] %vm721, 0.0
          %730 = vst.msk [vmem:[#allocation5] sm:$0xff] %vm716, 0.0
          %731 = vst.msk [vmem:[#allocation5 + $0x8] sm:$0xff] %vm716, 0.0
          %732 = vst.msk [vmem:[#allocation5 + $0x10] sm:$0xff] %vm716, 0.0
          %733 = vst.msk [vmem:[#allocation5 + $0x18] sm:$0xff] %vm716, 0.0
        $region104: #{tpu_custom_call.1} parent=71 // pred_fallthru
          _
        %v734 = vld [vmem:[%s538] sm:$0xff]
        %v735 = vld [vmem:[#allocation14] sm:$0xff]
        %v736 = vld [vmem:[#allocation14 + $0x8] sm:$0xff]
        %v737 = vld [vmem:[#allocation14 + $0x10] sm:$0xff]
        %v738 = vld [vmem:[#allocation14 + $0x18] sm:$0xff]
        %v739 = vld [vmem:[%s6] sm:$0x1]
        %v741 = vlaneseq
        %v742 = vshrl.u32 %v741, 7
        %v743 = vsub.s32 0, %v742
        %v744 = vrot.slane %v739, %v743
        %vm746 = vcmask 261120
        %v748 = vsel %vm746, %v734, 0
        %750 = vmatprep.subr.mxu0 0.0
        %751 = vmatpush1.msra.mxu0 %v735
        %752 = vmatprep.subr.mxu0 0.0
        %753 = vmatpush1.msra.mxu0 %v736
        %754 = vmatprep.subr.mxu0 0.0
        %755 = vmatpush1.msra.mxu0 %v737
        %756 = vmatprep.subr.mxu0 0.0
        %757 = vmatpush1.msra.mxu0 %v738
        %758 = vmatprep.subr.mxu0 0.0
        %759 = vmatpush1.msra.mxu0 0.0
        %760 = vmatprep.subr.mxu0 0.0
        %761 = vmatpush1.msra.mxu0 0.0
        %762 = vmatprep.subr.mxu0 0.0
        %763 = vmatpush1.msra.mxu0 0.0
        %764 = vmatprep.subr.mxu0 0.0
        %765 = vmatpush1.msra.mxu0 0.0
        %766 = vmatprep.subr.mxu0 0.0
        %767 = vmatpush1.msra.mxu0 0.0
        %768 = vmatprep.subr.mxu0 0.0
        %769 = vmatpush1.msra.mxu0 0.0
        %770 = vmatprep.subr.mxu0 0.0
        %771 = vmatpush1.msra.mxu0 0.0
        %772 = vmatprep.subr.mxu0 0.0
        %773 = vmatpush1.msra.mxu0 0.0
        %774 = vmatprep.subr.mxu0 0.0
        %775 = vmatpush1.msra.mxu0 0.0
        %776 = vmatprep.subr.mxu0 0.0
        %777 = vmatpush1.msra.mxu0 0.0
        %778 = vmatprep.subr.mxu0 0.0
        %779 = vmatpush1.msra.mxu0 0.0
        %780 = vmatprep.subr.mxu0 0.0
        %781 = vmatpush1.msra.mxu0 0.0
        %782 = vmatprep.subr.mxu0 0.0
        %783 = vmatpush1.msra.mxu0 0.0
        %784 = vmatprep.subr.mxu0 0.0
        %785 = vmatpush1.msra.mxu0 0.0
        %786 = vmatprep.subr.mxu0 0.0
        %787 = vmatpush1.msra.mxu0 0.0
        %788 = vmatprep.subr.mxu0 0.0
        %789 = vmatpush1.msra.mxu0 0.0
        %790 = vmatprep.subr.mxu0 0.0
        %791 = vmatpush1.msra.mxu0 0.0
        %792 = vmatprep.subr.mxu0 0.0
        %793 = vmatpush1.msra.mxu0 0.0
        %794 = vmatprep.subr.mxu0 0.0
        %795 = vmatpush1.msra.mxu0 0.0
        %796 = vmatprep.subr.mxu0 0.0
        %797 = vmatpush1.msra.mxu0 0.0
        %798 = vmatprep.subr.mxu0 0.0
        %799 = vmatpush1.msra.mxu0 0.0
        %800 = vmatprep.subr.mxu0 0.0
        %801 = vmatpush1.msra.mxu0 0.0
        %802 = vmatprep.subr.mxu0 0.0
        %803 = vmatpush1.msra.mxu0 0.0
        %804 = vmatprep.subr.mxu0 0.0
        %805 = vmatpush1.msra.mxu0 0.0
        %806 = vmatprep.subr.mxu0 0.0
        %807 = vmatpush1.msra.mxu0 0.0
        %808 = vmatprep.subr.mxu0 0.0
        %809 = vmatpush1.msra.mxu0 0.0
        %810 = vmatprep.subr.mxu0 0.0
        %811 = vmatpush1.msra.mxu0 0.0
        %812 = vmatprep.subr.mxu0 0.0
        %813 = vmatpush1.msra.mxu0 0.0
        %814 = vmatprep.mubr.f32.mxu0 0.0
        %815 = vmatmul.mubr.f32.gmra.mrb[0].mxu0 %v748
        %v816 = vpop.f32.mrb[0].mxu0
        %v817 = vadd.f32 %v744, %v816
        %v818 = vpop.f32.mrb[0].mxu0
        %819 = vdwg.mxu0
        %v820 = vld [vmem:[%s547] sm:$0xff]
        %v821 = vld [vmem:[#allocation15] sm:$0xff]
        %v822 = vld [vmem:[#allocation15 + $0x8] sm:$0xff]
        %v823 = vld [vmem:[#allocation15 + $0x10] sm:$0xff]
        %v824 = vld [vmem:[#allocation15 + $0x18] sm:$0xff]
        %v825 = vld [vmem:[#allocation17] sm:$0x1]
        %v827 = vlaneseq
        %v828 = vshrl.u32 %v827, 7
        %v829 = vsub.s32 0, %v828
        %v830 = vrot.slane %v825, %v829
        %v833 = vsel %vm746, %v820, 0
        %835 = vmatprep.subr.mxu0 0.0
        %836 = vmatpush1.msra.mxu0 %v821
        %837 = vmatprep.subr.mxu0 0.0
        %838 = vmatpush1.msra.mxu0 %v822
        %839 = vmatprep.subr.mxu0 0.0
        %840 = vmatpush1.msra.mxu0 %v823
        %841 = vmatprep.subr.mxu0 0.0
        %842 = vmatpush1.msra.mxu0 %v824
        %843 = vmatprep.subr.mxu0 0.0
        %844 = vmatpush1.msra.mxu0 0.0
        %845 = vmatprep.subr.mxu0 0.0
        %846 = vmatpush1.msra.mxu0 0.0
        %847 = vmatprep.subr.mxu0 0.0
        %848 = vmatpush1.msra.mxu0 0.0
        %849 = vmatprep.subr.mxu0 0.0
        %850 = vmatpush1.msra.mxu0 0.0
        %851 = vmatprep.subr.mxu0 0.0
        %852 = vmatpush1.msra.mxu0 0.0
        %853 = vmatprep.subr.mxu0 0.0
        %854 = vmatpush1.msra.mxu0 0.0
        %855 = vmatprep.subr.mxu0 0.0
        %856 = vmatpush1.msra.mxu0 0.0
        %857 = vmatprep.subr.mxu0 0.0
        %858 = vmatpush1.msra.mxu0 0.0
        %859 = vmatprep.subr.mxu0 0.0
        %860 = vmatpush1.msra.mxu0 0.0
        %861 = vmatprep.subr.mxu0 0.0
        %862 = vmatpush1.msra.mxu0 0.0
        %863 = vmatprep.subr.mxu0 0.0
        %864 = vmatpush1.msra.mxu0 0.0
        %865 = vmatprep.subr.mxu0 0.0
        %866 = vmatpush1.msra.mxu0 0.0
        %867 = vmatprep.subr.mxu0 0.0
        %868 = vmatpush1.msra.mxu0 0.0
        %869 = vmatprep.subr.mxu0 0.0
        %870 = vmatpush1.msra.mxu0 0.0
        %871 = vmatprep.subr.mxu0 0.0
        %872 = vmatpush1.msra.mxu0 0.0
        %873 = vmatprep.subr.mxu0 0.0
        %874 = vmatpush1.msra.mxu0 0.0
        %875 = vmatprep.subr.mxu0 0.0
        %876 = vmatpush1.msra.mxu0 0.0
        %877 = vmatprep.subr.mxu0 0.0
        %878 = vmatpush1.msra.mxu0 0.0
        %879 = vmatprep.subr.mxu0 0.0
        %880 = vmatpush1.msra.mxu0 0.0
        %881 = vmatprep.subr.mxu0 0.0
        %882 = vmatpush1.msra.mxu0 0.0
        %883 = vmatprep.subr.mxu0 0.0
        %884 = vmatpush1.msra.mxu0 0.0
        %885 = vmatprep.subr.mxu0 0.0
        %886 = vmatpush1.msra.mxu0 0.0
        %887 = vmatprep.subr.mxu0 0.0
        %888 = vmatpush1.msra.mxu0 0.0
        %889 = vmatprep.subr.mxu0 0.0
        %890 = vmatpush1.msra.mxu0 0.0
        %891 = vmatprep.subr.mxu0 0.0
        %892 = vmatpush1.msra.mxu0 0.0
        %893 = vmatprep.subr.mxu0 0.0
        %894 = vmatpush1.msra.mxu0 0.0
        %895 = vmatprep.subr.mxu0 0.0
        %896 = vmatpush1.msra.mxu0 0.0
        %897 = vmatprep.subr.mxu0 0.0
        %898 = vmatpush1.msra.mxu0 0.0
        %899 = vmatprep.mubr.f32.mxu0 0.0
        %900 = vmatmul.mubr.f32.gmra.mrb[0].mxu0 %v833
        %v901 = vpop.f32.mrb[0].mxu0
        %v902 = vadd.f32 %v830, %v901
        %v903 = vpop.f32.mrb[0].mxu0
        %904 = vdwg.mxu0
        %906 = vrot.lane.b32.xlu0 %v817, 120
        %v907 = vpop.permute.xlu0 %906
        %908 = vrot.lane.b32.xlu0 %v817, 112
        %v909 = vpop.permute.xlu0 %908
        %910 = vrot.lane.b32.xlu0 %v817, 104
        %v911 = vpop.permute.xlu0 %910
        %913 = vrot.lane.b32.xlu0 %v902, 120
        %v914 = vpop.permute.xlu0 %913
        %916 = vrot.lane.b32.xlu0 %v902, 112
        %v917 = vpop.permute.xlu0 %916
        %919 = vrot.lane.b32.xlu0 %v902, 104
        %v920 = vpop.permute.xlu0 %919
        %v922 = vld [vmem:[#allocation2] sm:$0xff]
        %v923 = vld [vmem:[#allocation2 + $0x8] sm:$0xff]
        %v924 = vld [vmem:[#allocation2 + $0x10] sm:$0xff]
        %v925 = vld [vmem:[#allocation2 + $0x18] sm:$0xff]
        %vm926 = vcmask 64512
        %v928 = vsel %vm926, %v922, 0
        %v930 = vsel %vm926, %v817, 0
        %932 = vmatprep.subr.mxu0 0.0
        %933 = vmatpush1.xpose.msra.mxu0 %v930
        %934 = vmatprep.subr.mxu0 0.0
        %935 = vmatpush1.xpose.msra.mxu0 0.0
        %936 = vmatprep.subr.mxu0 0.0
        %937 = vmatpush1.xpose.msra.mxu0 0.0
        %938 = vmatprep.subr.mxu0 0.0
        %939 = vmatpush1.xpose.msra.mxu0 0.0
        %940 = vmatprep.subr.mxu0 0.0
        %941 = vmatpush1.xpose.msra.mxu0 0.0
        %942 = vmatprep.subr.mxu0 0.0
        %943 = vmatpush1.xpose.msra.mxu0 0.0
        %944 = vmatprep.subr.mxu0 0.0
        %945 = vmatpush1.xpose.msra.mxu0 0.0
        %946 = vmatprep.subr.mxu0 0.0
        %947 = vmatpush1.xpose.msra.mxu0 0.0
        %948 = vmatprep.subr.mxu0 0.0
        %949 = vmatpush1.xpose.msra.mxu0 0.0
        %950 = vmatprep.subr.mxu0 0.0
        %951 = vmatpush1.xpose.msra.mxu0 0.0
        %952 = vmatprep.subr.mxu0 0.0
        %953 = vmatpush1.xpose.msra.mxu0 0.0
        %954 = vmatprep.subr.mxu0 0.0
        %955 = vmatpush1.xpose.msra.mxu0 0.0
        %956 = vmatprep.subr.mxu0 0.0
        %957 = vmatpush1.xpose.msra.mxu0 0.0
        %958 = vmatprep.subr.mxu0 0.0
        %959 = vmatpush1.xpose.msra.mxu0 0.0
        %960 = vmatprep.subr.mxu0 0.0
        %961 = vmatpush1.xpose.msra.mxu0 0.0
        %962 = vmatprep.subr.mxu0 0.0
        %963 = vmatpush1.xpose.msra.mxu0 0.0
        %964 = vmatprep.subr.mxu0 0.0
        %965 = vmatpush1.xpose.msra.mxu0 0.0
        %966 = vmatprep.subr.mxu0 0.0
        %967 = vmatpush1.xpose.msra.mxu0 0.0
        %968 = vmatprep.subr.mxu0 0.0
        %969 = vmatpush1.xpose.msra.mxu0 0.0
        %970 = vmatprep.subr.mxu0 0.0
        %971 = vmatpush1.xpose.msra.mxu0 0.0
        %972 = vmatprep.subr.mxu0 0.0
        %973 = vmatpush1.xpose.msra.mxu0 0.0
        %974 = vmatprep.subr.mxu0 0.0
        %975 = vmatpush1.xpose.msra.mxu0 0.0
        %976 = vmatprep.subr.mxu0 0.0
        %977 = vmatpush1.xpose.msra.mxu0 0.0
        %978 = vmatprep.subr.mxu0 0.0
        %979 = vmatpush1.xpose.msra.mxu0 0.0
        %980 = vmatprep.subr.mxu0 0.0
        %981 = vmatpush1.xpose.msra.mxu0 0.0
        %982 = vmatprep.subr.mxu0 0.0
        %983 = vmatpush1.xpose.msra.mxu0 0.0
        %984 = vmatprep.subr.mxu0 0.0
        %985 = vmatpush1.xpose.msra.mxu0 0.0
        %986 = vmatprep.subr.mxu0 0.0
        %987 = vmatpush1.xpose.msra.mxu0 0.0
        %988 = vmatprep.subr.mxu0 0.0
        %989 = vmatpush1.xpose.msra.mxu0 0.0
        %990 = vmatprep.subr.mxu0 0.0
        %991 = vmatpush1.xpose.msra.mxu0 0.0
        %992 = vmatprep.subr.mxu0 0.0
        %993 = vmatpush1.xpose.msra.mxu0 0.0
        %994 = vmatprep.subr.mxu0 0.0
        %995 = vmatpush1.xpose.msra.mxu0 0.0
        %996 = vmatprep.mubr.f32.mxu0 0.0
        %997 = vmatmul.mubr.f32.gmra.mrb[0].mxu0 %v928
        %v998 = vpop.f32.mrb[0].mxu0
        %v999 = vadd.f32 0.0, %v998
        %v1000 = vpop.f32.mrb[0].mxu0
        %1001 = vdwg.mxu0
        %v1003 = vsel %vm926, %v923, 0
        %v1005 = vsel %vm926, %v907, 0
        %1007 = vmatprep.subr.mxu0 0.0
        %1008 = vmatpush1.xpose.msra.mxu0 %v1005
        %1009 = vmatprep.subr.mxu0 0.0
        %1010 = vmatpush1.xpose.msra.mxu0 0.0
        %1011 = vmatprep.subr.mxu0 0.0
        %1012 = vmatpush1.xpose.msra.mxu0 0.0
        %1013 = vmatprep.subr.mxu0 0.0
        %1014 = vmatpush1.xpose.msra.mxu0 0.0
        %1015 = vmatprep.subr.mxu0 0.0
        %1016 = vmatpush1.xpose.msra.mxu0 0.0
        %1017 = vmatprep.subr.mxu0 0.0
        %1018 = vmatpush1.xpose.msra.mxu0 0.0
        %1019 = vmatprep.subr.mxu0 0.0
        %1020 = vmatpush1.xpose.msra.mxu0 0.0
        %1021 = vmatprep.subr.mxu0 0.0
        %1022 = vmatpush1.xpose.msra.mxu0 0.0
        %1023 = vmatprep.subr.mxu0 0.0
        %1024 = vmatpush1.xpose.msra.mxu0 0.0
        %1025 = vmatprep.subr.mxu0 0.0
        %1026 = vmatpush1.xpose.msra.mxu0 0.0
        %1027 = vmatprep.subr.mxu0 0.0
        %1028 = vmatpush1.xpose.msra.mxu0 0.0
        %1029 = vmatprep.subr.mxu0 0.0
        %1030 = vmatpush1.xpose.msra.mxu0 0.0
        %1031 = vmatprep.subr.mxu0 0.0
        %1032 = vmatpush1.xpose.msra.mxu0 0.0
        %1033 = vmatprep.subr.mxu0 0.0
        %1034 = vmatpush1.xpose.msra.mxu0 0.0
        %1035 = vmatprep.subr.mxu0 0.0
        %1036 = vmatpush1.xpose.msra.mxu0 0.0
        %1037 = vmatprep.subr.mxu0 0.0
        %1038 = vmatpush1.xpose.msra.mxu0 0.0
        %1039 = vmatprep.subr.mxu0 0.0
        %1040 = vmatpush1.xpose.msra.mxu0 0.0
        %1041 = vmatprep.subr.mxu0 0.0
        %1042 = vmatpush1.xpose.msra.mxu0 0.0
        %1043 = vmatprep.subr.mxu0 0.0
        %1044 = vmatpush1.xpose.msra.mxu0 0.0
        %1045 = vmatprep.subr.mxu0 0.0
        %1046 = vmatpush1.xpose.msra.mxu0 0.0
        %1047 = vmatprep.subr.mxu0 0.0
        %1048 = vmatpush1.xpose.msra.mxu0 0.0
        %1049 = vmatprep.subr.mxu0 0.0
        %1050 = vmatpush1.xpose.msra.mxu0 0.0
        %1051 = vmatprep.subr.mxu0 0.0
        %1052 = vmatpush1.xpose.msra.mxu0 0.0
        %1053 = vmatprep.subr.mxu0 0.0
        %1054 = vmatpush1.xpose.msra.mxu0 0.0
        %1055 = vmatprep.subr.mxu0 0.0
        %1056 = vmatpush1.xpose.msra.mxu0 0.0
        %1057 = vmatprep.subr.mxu0 0.0
        %1058 = vmatpush1.xpose.msra.mxu0 0.0
        %1059 = vmatprep.subr.mxu0 0.0
        %1060 = vmatpush1.xpose.msra.mxu0 0.0
        %1061 = vmatprep.subr.mxu0 0.0
        %1062 = vmatpush1.xpose.msra.mxu0 0.0
        %1063 = vmatprep.subr.mxu0 0.0
        %1064 = vmatpush1.xpose.msra.mxu0 0.0
        %1065 = vmatprep.subr.mxu0 0.0
        %1066 = vmatpush1.xpose.msra.mxu0 0.0
        %1067 = vmatprep.subr.mxu0 0.0
        %1068 = vmatpush1.xpose.msra.mxu0 0.0
        %1069 = vmatprep.subr.mxu0 0.0
        %1070 = vmatpush1.xpose.msra.mxu0 0.0
        %1071 = vmatprep.mubr.f32.mxu0 0.0
        %1072 = vmatmul.mubr.f32.gmra.mrb[0].mxu0 %v1003
        %v1073 = vpop.f32.mrb[0].mxu0
        %v1074 = vadd.f32 0.0, %v1073
        %v1075 = vpop.f32.mrb[0].mxu0
        %1076 = vdwg.mxu0
        %v1078 = vsel %vm926, %v924, 0
        %v1080 = vsel %vm926, %v909, 0
        %1082 = vmatprep.subr.mxu0 0.0
        %1083 = vmatpush1.xpose.msra.mxu0 %v1080
        %1084 = vmatprep.subr.mxu0 0.0
        %1085 = vmatpush1.xpose.msra.mxu0 0.0
        %1086 = vmatprep.subr.mxu0 0.0
        %1087 = vmatpush1.xpose.msra.mxu0 0.0
        %1088 = vmatprep.subr.mxu0 0.0
        %1089 = vmatpush1.xpose.msra.mxu0 0.0
        %1090 = vmatprep.subr.mxu0 0.0
        %1091 = vmatpush1.xpose.msra.mxu0 0.0
        %1092 = vmatprep.subr.mxu0 0.0
        %1093 = vmatpush1.xpose.msra.mxu0 0.0
        %1094 = vmatprep.subr.mxu0 0.0
        %1095 = vmatpush1.xpose.msra.mxu0 0.0
        %1096 = vmatprep.subr.mxu0 0.0
        %1097 = vmatpush1.xpose.msra.mxu0 0.0
        %1098 = vmatprep.subr.mxu0 0.0
        %1099 = vmatpush1.xpose.msra.mxu0 0.0
        %1100 = vmatprep.subr.mxu0 0.0
        %1101 = vmatpush1.xpose.msra.mxu0 0.0
        %1102 = vmatprep.subr.mxu0 0.0
        %1103 = vmatpush1.xpose.msra.mxu0 0.0
        %1104 = vmatprep.subr.mxu0 0.0
        %1105 = vmatpush1.xpose.msra.mxu0 0.0
        %1106 = vmatprep.subr.mxu0 0.0
        %1107 = vmatpush1.xpose.msra.mxu0 0.0
        %1108 = vmatprep.subr.mxu0 0.0
        %1109 = vmatpush1.xpose.msra.mxu0 0.0
        %1110 = vmatprep.subr.mxu0 0.0
        %1111 = vmatpush1.xpose.msra.mxu0 0.0
        %1112 = vmatprep.subr.mxu0 0.0
        %1113 = vmatpush1.xpose.msra.mxu0 0.0
        %1114 = vmatprep.subr.mxu0 0.0
        %1115 = vmatpush1.xpose.msra.mxu0 0.0
        %1116 = vmatprep.subr.mxu0 0.0
        %1117 = vmatpush1.xpose.msra.mxu0 0.0
        %1118 = vmatprep.subr.mxu0 0.0
        %1119 = vmatpush1.xpose.msra.mxu0 0.0
        %1120 = vmatprep.subr.mxu0 0.0
        %1121 = vmatpush1.xpose.msra.mxu0 0.0
        %1122 = vmatprep.subr.mxu0 0.0
        %1123 = vmatpush1.xpose.msra.mxu0 0.0
        %1124 = vmatprep.subr.mxu0 0.0
        %1125 = vmatpush1.xpose.msra.mxu0 0.0
        %1126 = vmatprep.subr.mxu0 0.0
        %1127 = vmatpush1.xpose.msra.mxu0 0.0
        %1128 = vmatprep.subr.mxu0 0.0
        %1129 = vmatpush1.xpose.msra.mxu0 0.0
        %1130 = vmatprep.subr.mxu0 0.0
        %1131 = vmatpush1.xpose.msra.mxu0 0.0
        %1132 = vmatprep.subr.mxu0 0.0
        %1133 = vmatpush1.xpose.msra.mxu0 0.0
        %1134 = vmatprep.subr.mxu0 0.0
        %1135 = vmatpush1.xpose.msra.mxu0 0.0
        %1136 = vmatprep.subr.mxu0 0.0
        %1137 = vmatpush1.xpose.msra.mxu0 0.0
        %1138 = vmatprep.subr.mxu0 0.0
        %1139 = vmatpush1.xpose.msra.mxu0 0.0
        %1140 = vmatprep.subr.mxu0 0.0
        %1141 = vmatpush1.xpose.msra.mxu0 0.0
        %1142 = vmatprep.subr.mxu0 0.0
        %1143 = vmatpush1.xpose.msra.mxu0 0.0
        %1144 = vmatprep.subr.mxu0 0.0
        %1145 = vmatpush1.xpose.msra.mxu0 0.0
        %1146 = vmatprep.mubr.f32.mxu0 0.0
        %1147 = vmatmul.mubr.f32.gmra.mrb[0].mxu0 %v1078
        %v1148 = vpop.f32.mrb[0].mxu0
        %v1149 = vadd.f32 0.0, %v1148
        %v1150 = vpop.f32.mrb[0].mxu0
        %1151 = vdwg.mxu0
        %v1153 = vsel %vm926, %v925, 0
        %v1155 = vsel %vm926, %v911, 0
        %1157 = vmatprep.subr.mxu0 0.0
        %1158 = vmatpush1.xpose.msra.mxu0 %v1155
        %1159 = vmatprep.subr.mxu0 0.0
        %1160 = vmatpush1.xpose.msra.mxu0 0.0
        %1161 = vmatprep.subr.mxu0 0.0
        %1162 = vmatpush1.xpose.msra.mxu0 0.0
        %1163 = vmatprep.subr.mxu0 0.0
        %1164 = vmatpush1.xpose.msra.mxu0 0.0
        %1165 = vmatprep.subr.mxu0 0.0
        %1166 = vmatpush1.xpose.msra.mxu0 0.0
        %1167 = vmatprep.subr.mxu0 0.0
        %1168 = vmatpush1.xpose.msra.mxu0 0.0
        %1169 = vmatprep.subr.mxu0 0.0
        %1170 = vmatpush1.xpose.msra.mxu0 0.0
        %1171 = vmatprep.subr.mxu0 0.0
        %1172 = vmatpush1.xpose.msra.mxu0 0.0
        %1173 = vmatprep.subr.mxu0 0.0
        %1174 = vmatpush1.xpose.msra.mxu0 0.0
        %1175 = vmatprep.subr.mxu0 0.0
        %1176 = vmatpush1.xpose.msra.mxu0 0.0
        %1177 = vmatprep.subr.mxu0 0.0
        %1178 = vmatpush1.xpose.msra.mxu0 0.0
        %1179 = vmatprep.subr.mxu0 0.0
        %1180 = vmatpush1.xpose.msra.mxu0 0.0
        %1181 = vmatprep.subr.mxu0 0.0
        %1182 = vmatpush1.xpose.msra.mxu0 0.0
        %1183 = vmatprep.subr.mxu0 0.0
        %1184 = vmatpush1.xpose.msra.mxu0 0.0
        %1185 = vmatprep.subr.mxu0 0.0
        %1186 = vmatpush1.xpose.msra.mxu0 0.0
        %1187 = vmatprep.subr.mxu0 0.0
        %1188 = vmatpush1.xpose.msra.mxu0 0.0
        %1189 = vmatprep.subr.mxu0 0.0
        %1190 = vmatpush1.xpose.msra.mxu0 0.0
        %1191 = vmatprep.subr.mxu0 0.0
        %1192 = vmatpush1.xpose.msra.mxu0 0.0
        %1193 = vmatprep.subr.mxu0 0.0
        %1194 = vmatpush1.xpose.msra.mxu0 0.0
        %1195 = vmatprep.subr.mxu0 0.0
        %1196 = vmatpush1.xpose.msra.mxu0 0.0
        %1197 = vmatprep.subr.mxu0 0.0
        %1198 = vmatpush1.xpose.msra.mxu0 0.0
        %1199 = vmatprep.subr.mxu0 0.0
        %1200 = vmatpush1.xpose.msra.mxu0 0.0
        %1201 = vmatprep.subr.mxu0 0.0
        %1202 = vmatpush1.xpose.msra.mxu0 0.0
        %1203 = vmatprep.subr.mxu0 0.0
        %1204 = vmatpush1.xpose.msra.mxu0 0.0
        %1205 = vmatprep.subr.mxu0 0.0
        %1206 = vmatpush1.xpose.msra.mxu0 0.0
        %1207 = vmatprep.subr.mxu0 0.0
        %1208 = vmatpush1.xpose.msra.mxu0 0.0
        %1209 = vmatprep.subr.mxu0 0.0
        %1210 = vmatpush1.xpose.msra.mxu0 0.0
        %1211 = vmatprep.subr.mxu0 0.0
        %1212 = vmatpush1.xpose.msra.mxu0 0.0
        %1213 = vmatprep.subr.mxu0 0.0
        %1214 = vmatpush1.xpose.msra.mxu0 0.0
        %1215 = vmatprep.subr.mxu0 0.0
        %1216 = vmatpush1.xpose.msra.mxu0 0.0
        %1217 = vmatprep.subr.mxu0 0.0
        %1218 = vmatpush1.xpose.msra.mxu0 0.0
        %1219 = vmatprep.subr.mxu0 0.0
        %1220 = vmatpush1.xpose.msra.mxu0 0.0
        %1221 = vmatprep.mubr.f32.mxu0 0.0
        %1222 = vmatmul.mubr.f32.gmra.mrb[0].mxu0 %v1153
        %v1223 = vpop.f32.mrb[0].mxu0
        %v1224 = vadd.f32 0.0, %v1223
        %v1225 = vpop.f32.mrb[0].mxu0
        %1226 = vdwg.mxu0
        %v1227 = vld [vmem:[#allocation3] sm:$0xff]
        %v1228 = vld [vmem:[#allocation3 + $0x8] sm:$0xff]
        %v1229 = vld [vmem:[#allocation3 + $0x10] sm:$0xff]
        %v1230 = vld [vmem:[#allocation3 + $0x18] sm:$0xff]
        %v1231 = vsel %vm926, %v999, -inf
        %1232 = vmax.xlane.f32.xlu0 %v1231
        %v1233 = vpop.xlane.xlu0 %1232
        %v1234 = vsel %vm926, %v1074, -inf
        %1235 = vmax.xlane.f32.xlu0 %v1234
        %v1236 = vpop.xlane.xlu0 %1235
        %v1237 = vsel %vm926, %v1149, -inf
        %1238 = vmax.xlane.f32.xlu0 %v1237
        %v1239 = vpop.xlane.xlu0 %1238
        %v1240 = vsel %vm926, %v1224, -inf
        %1241 = vmax.xlane.f32.xlu0 %v1240
        %v1242 = vpop.xlane.xlu0 %1241
        %v1243 = vmax.f32 %v1227, %v1233
        %v1244 = vmax.f32 %v1228, %v1236
        %v1245 = vmax.f32 %v1229, %v1239
        %v1246 = vmax.f32 %v1230, %v1242
        %v1247 = vsub.f32 %v1227, %v1243
        %v1248 = vsub.f32 %v1228, %v1244
        %v1249 = vsub.f32 %v1229, %v1245
        %v1250 = vsub.f32 %v1230, %v1246
        %v1251 = vmul.f32 %v1247, 1.442695
        %v1252 = vpow.pop %v1251
        %v1253 = vmul.f32 %v1248, 1.442695
        %v1254 = vpow.pop %v1253
        %v1255 = vmul.f32 %v1249, 1.442695
        %v1256 = vpow.pop %v1255
        %v1257 = vmul.f32 %v1250, 1.442695
        %v1258 = vpow.pop %v1257
        %1260 = vset.pattern.permute.xlu0 0
        %1261 = vperm.xlu0 %1260, %v1243
        %v1262 = vpop.permute.xlu0 %1261
        %1265 = vset.pattern.permute.xlu0 0
        %1266 = vperm.xlu0 %1265, %v1244
        %v1267 = vpop.permute.xlu0 %1266
        %1270 = vset.pattern.permute.xlu0 0
        %1271 = vperm.xlu0 %1270, %v1245
        %v1272 = vpop.permute.xlu0 %1271
        %1275 = vset.pattern.permute.xlu0 0
        %1276 = vperm.xlu0 %1275, %v1246
        %v1277 = vpop.permute.xlu0 %1276
        %v1279 = vsub.f32 %v999, %v1262
        %v1280 = vsub.f32 %v1074, %v1267
        %v1281 = vsub.f32 %v1149, %v1272
        %v1282 = vsub.f32 %v1224, %v1277
        %v1283 = vmul.f32 %v1279, 1.442695
        %v1284 = vpow.pop %v1283
        %v1285 = vmul.f32 %v1280, 1.442695
        %v1286 = vpow.pop %v1285
        %v1287 = vmul.f32 %v1281, 1.442695
        %v1288 = vpow.pop %v1287
        %v1289 = vmul.f32 %v1282, 1.442695
        %v1290 = vpow.pop %v1289
        %v1291 = vld [vmem:[#allocation4] sm:$0xff]
        %v1292 = vld [vmem:[#allocation4 + $0x8] sm:$0xff]
        %v1293 = vld [vmem:[#allocation4 + $0x10] sm:$0xff]
        %v1294 = vld [vmem:[#allocation4 + $0x18] sm:$0xff]
        %v1295 = vmul.f32 %v1252, %v1291
        %v1296 = vmul.f32 %v1254, %v1292
        %v1297 = vmul.f32 %v1256, %v1293
        %v1298 = vmul.f32 %v1258, %v1294
        %v1299 = vsel %vm926, %v1284, 0.0
        %1300 = vadd.xlane.f32.xlu0 %v1299
        %v1301 = vpop.xlane.xlu0 %1300
        %v1302 = vsel %vm926, %v1286, 0.0
        %1303 = vadd.xlane.f32.xlu0 %v1302
        %v1304 = vpop.xlane.xlu0 %1303
        %v1305 = vsel %vm926, %v1288, 0.0
        %1306 = vadd.xlane.f32.xlu0 %v1305
        %v1307 = vpop.xlane.xlu0 %1306
        %v1308 = vsel %vm926, %v1290, 0.0
        %1309 = vadd.xlane.f32.xlu0 %v1308
        %v1310 = vpop.xlane.xlu0 %1309
        %v1311 = vadd.f32 %v1295, %v1301
        %v1312 = vadd.f32 %v1296, %v1304
        %v1313 = vadd.f32 %v1297, %v1307
        %v1314 = vadd.f32 %v1298, %v1310
        %vm1315 = vcmask 7168
        %1316 = vst.msk [vmem:[#allocation4] sm:$0xff] %vm1315, %v1311
        %1317 = vst.msk [vmem:[#allocation4 + $0x8] sm:$0xff] %vm1315, %v1312
        %1318 = vst.msk [vmem:[#allocation4 + $0x10] sm:$0xff] %vm1315, %v1313
        %1319 = vst.msk [vmem:[#allocation4 + $0x18] sm:$0xff] %vm1315, %v1314
        %v1321 = vsel %vm926, %v1284, 0
        %1323 = vmatprep.subr.mxu0 0.0
        %1324 = vmatpush1.msra.mxu0 %v902
        %1325 = vmatprep.subr.mxu0 0.0
        %1326 = vmatpush1.msra.mxu0 0.0
        %1327 = vmatprep.subr.mxu0 0.0
        %1328 = vmatpush1.msra.mxu0 0.0
        %1329 = vmatprep.subr.mxu0 0.0
        %1330 = vmatpush1.msra.mxu0 0.0
        %1331 = vmatprep.subr.mxu0 0.0
        %1332 = vmatpush1.msra.mxu0 0.0
        %1333 = vmatprep.subr.mxu0 0.0
        %1334 = vmatpush1.msra.mxu0 0.0
        %1335 = vmatprep.subr.mxu0 0.0
        %1336 = vmatpush1.msra.mxu0 0.0
        %1337 = vmatprep.subr.mxu0 0.0
        %1338 = vmatpush1.msra.mxu0 0.0
        %1339 = vmatprep.subr.mxu0 0.0
        %1340 = vmatpush1.msra.mxu0 0.0
        %1341 = vmatprep.subr.mxu0 0.0
        %1342 = vmatpush1.msra.mxu0 0.0
        %1343 = vmatprep.subr.mxu0 0.0
        %1344 = vmatpush1.msra.mxu0 0.0
        %1345 = vmatprep.subr.mxu0 0.0
        %1346 = vmatpush1.msra.mxu0 0.0
        %1347 = vmatprep.subr.mxu0 0.0
        %1348 = vmatpush1.msra.mxu0 0.0
        %1349 = vmatprep.subr.mxu0 0.0
        %1350 = vmatpush1.msra.mxu0 0.0
        %1351 = vmatprep.subr.mxu0 0.0
        %1352 = vmatpush1.msra.mxu0 0.0
        %1353 = vmatprep.subr.mxu0 0.0
        %1354 = vmatpush1.msra.mxu0 0.0
        %1355 = vmatprep.subr.mxu0 0.0
        %1356 = vmatpush1.msra.mxu0 0.0
        %1357 = vmatprep.subr.mxu0 0.0
        %1358 = vmatpush1.msra.mxu0 0.0
        %1359 = vmatprep.subr.mxu0 0.0
        %1360 = vmatpush1.msra.mxu0 0.0
        %1361 = vmatprep.subr.mxu0 0.0
        %1362 = vmatpush1.msra.mxu0 0.0
        %1363 = vmatprep.subr.mxu0 0.0
        %1364 = vmatpush1.msra.mxu0 0.0
        %1365 = vmatprep.subr.mxu0 0.0
        %1366 = vmatpush1.msra.mxu0 0.0
        %1367 = vmatprep.subr.mxu0 0.0
        %1368 = vmatpush1.msra.mxu0 0.0
        %1369 = vmatprep.subr.mxu0 0.0
        %1370 = vmatpush1.msra.mxu0 0.0
        %1371 = vmatprep.subr.mxu0 0.0
        %1372 = vmatpush1.msra.mxu0 0.0
        %1373 = vmatprep.subr.mxu0 0.0
        %1374 = vmatpush1.msra.mxu0 0.0
        %1375 = vmatprep.subr.mxu0 0.0
        %1376 = vmatpush1.msra.mxu0 0.0
        %1377 = vmatprep.subr.mxu0 0.0
        %1378 = vmatpush1.msra.mxu0 0.0
        %1379 = vmatprep.subr.mxu0 0.0
        %1380 = vmatpush1.msra.mxu0 0.0
        %1381 = vmatprep.subr.mxu0 0.0
        %1382 = vmatpush1.msra.mxu0 0.0
        %1383 = vmatprep.subr.mxu0 0.0
        %1384 = vmatpush1.msra.mxu0 0.0
        %1385 = vmatprep.subr.mxu0 0.0
        %1386 = vmatpush1.msra.mxu0 0.0
        %1387 = vmatprep.mubr.f32.mxu0 0.0
        %1388 = vmatmul.mubr.f32.gmra.mrb[0].mxu0 %v1321
        %v1389 = vpop.f32.mrb[0].mxu0
        %v1390 = vadd.f32 0.0, %v1389
        %v1391 = vpop.f32.mrb[0].mxu0
        %1392 = vdwg.mxu0
        %v1394 = vsel %vm926, %v1286, 0
        %1396 = vmatprep.subr.mxu0 0.0
        %1397 = vmatpush1.msra.mxu0 %v914
        %1398 = vmatprep.subr.mxu0 0.0
        %1399 = vmatpush1.msra.mxu0 0.0
        %1400 = vmatprep.subr.mxu0 0.0
        %1401 = vmatpush1.msra.mxu0 0.0
        %1402 = vmatprep.subr.mxu0 0.0
        %1403 = vmatpush1.msra.mxu0 0.0
        %1404 = vmatprep.subr.mxu0 0.0
        %1405 = vmatpush1.msra.mxu0 0.0
        %1406 = vmatprep.subr.mxu0 0.0
        %1407 = vmatpush1.msra.mxu0 0.0
        %1408 = vmatprep.subr.mxu0 0.0
        %1409 = vmatpush1.msra.mxu0 0.0
        %1410 = vmatprep.subr.mxu0 0.0
        %1411 = vmatpush1.msra.mxu0 0.0
        %1412 = vmatprep.subr.mxu0 0.0
        %1413 = vmatpush1.msra.mxu0 0.0
        %1414 = vmatprep.subr.mxu0 0.0
        %1415 = vmatpush1.msra.mxu0 0.0
        %1416 = vmatprep.subr.mxu0 0.0
        %1417 = vmatpush1.msra.mxu0 0.0
        %1418 = vmatprep.subr.mxu0 0.0
        %1419 = vmatpush1.msra.mxu0 0.0
        %1420 = vmatprep.subr.mxu0 0.0
        %1421 = vmatpush1.msra.mxu0 0.0
        %1422 = vmatprep.subr.mxu0 0.0
        %1423 = vmatpush1.msra.mxu0 0.0
        %1424 = vmatprep.subr.mxu0 0.0
        %1425 = vmatpush1.msra.mxu0 0.0
        %1426 = vmatprep.subr.mxu0 0.0
        %1427 = vmatpush1.msra.mxu0 0.0
        %1428 = vmatprep.subr.mxu0 0.0
        %1429 = vmatpush1.msra.mxu0 0.0
        %1430 = vmatprep.subr.mxu0 0.0
        %1431 = vmatpush1.msra.mxu0 0.0
        %1432 = vmatprep.subr.mxu0 0.0
        %1433 = vmatpush1.msra.mxu0 0.0
        %1434 = vmatprep.subr.mxu0 0.0
        %1435 = vmatpush1.msra.mxu0 0.0
        %1436 = vmatprep.subr.mxu0 0.0
        %1437 = vmatpush1.msra.mxu0 0.0
        %1438 = vmatprep.subr.mxu0 0.0
        %1439 = vmatpush1.msra.mxu0 0.0
        %1440 = vmatprep.subr.mxu0 0.0
        %1441 = vmatpush1.msra.mxu0 0.0
        %1442 = vmatprep.subr.mxu0 0.0
        %1443 = vmatpush1.msra.mxu0 0.0
        %1444 = vmatprep.subr.mxu0 0.0
        %1445 = vmatpush1.msra.mxu0 0.0
        %1446 = vmatprep.subr.mxu0 0.0
        %1447 = vmatpush1.msra.mxu0 0.0
        %1448 = vmatprep.subr.mxu0 0.0
        %1449 = vmatpush1.msra.mxu0 0.0
        %1450 = vmatprep.subr.mxu0 0.0
        %1451 = vmatpush1.msra.mxu0 0.0
        %1452 = vmatprep.subr.mxu0 0.0
        %1453 = vmatpush1.msra.mxu0 0.0
        %1454 = vmatprep.subr.mxu0 0.0
        %1455 = vmatpush1.msra.mxu0 0.0
        %1456 = vmatprep.subr.mxu0 0.0
        %1457 = vmatpush1.msra.mxu0 0.0
        %1458 = vmatprep.subr.mxu0 0.0
        %1459 = vmatpush1.msra.mxu0 0.0
        %1460 = vmatprep.mubr.f32.mxu0 0.0
        %1461 = vmatmul.mubr.f32.gmra.mrb[0].mxu0 %v1394
        %v1462 = vpop.f32.mrb[0].mxu0
        %v1463 = vadd.f32 0.0, %v1462
        %v1464 = vpop.f32.mrb[0].mxu0
        %1465 = vdwg.mxu0
        %v1467 = vsel %vm926, %v1288, 0
        %1469 = vmatprep.subr.mxu0 0.0
        %1470 = vmatpush1.msra.mxu0 %v917
        %1471 = vmatprep.subr.mxu0 0.0
        %1472 = vmatpush1.msra.mxu0 0.0
        %1473 = vmatprep.subr.mxu0 0.0
        %1474 = vmatpush1.msra.mxu0 0.0
        %1475 = vmatprep.subr.mxu0 0.0
        %1476 = vmatpush1.msra.mxu0 0.0
        %1477 = vmatprep.subr.mxu0 0.0
        %1478 = vmatpush1.msra.mxu0 0.0
        %1479 = vmatprep.subr.mxu0 0.0
        %1480 = vmatpush1.msra.mxu0 0.0
        %1481 = vmatprep.subr.mxu0 0.0
        %1482 = vmatpush1.msra.mxu0 0.0
        %1483 = vmatprep.subr.mxu0 0.0
        %1484 = vmatpush1.msra.mxu0 0.0
        %1485 = vmatprep.subr.mxu0 0.0
        %1486 = vmatpush1.msra.mxu0 0.0
        %1487 = vmatprep.subr.mxu0 0.0
        %1488 = vmatpush1.msra.mxu0 0.0
        %1489 = vmatprep.subr.mxu0 0.0
        %1490 = vmatpush1.msra.mxu0 0.0
        %1491 = vmatprep.subr.mxu0 0.0
        %1492 = vmatpush1.msra.mxu0 0.0
        %1493 = vmatprep.subr.mxu0 0.0
        %1494 = vmatpush1.msra.mxu0 0.0
        %1495 = vmatprep.subr.mxu0 0.0
        %1496 = vmatpush1.msra.mxu0 0.0
        %1497 = vmatprep.subr.mxu0 0.0
        %1498 = vmatpush1.msra.mxu0 0.0
        %1499 = vmatprep.subr.mxu0 0.0
        %1500 = vmatpush1.msra.mxu0 0.0
        %1501 = vmatprep.subr.mxu0 0.0
        %1502 = vmatpush1.msra.mxu0 0.0
        %1503 = vmatprep.subr.mxu0 0.0
        %1504 = vmatpush1.msra.mxu0 0.0
        %1505 = vmatprep.subr.mxu0 0.0
        %1506 = vmatpush1.msra.mxu0 0.0
        %1507 = vmatprep.subr.mxu0 0.0
        %1508 = vmatpush1.msra.mxu0 0.0
        %1509 = vmatprep.subr.mxu0 0.0
        %1510 = vmatpush1.msra.mxu0 0.0
        %1511 = vmatprep.subr.mxu0 0.0
        %1512 = vmatpush1.msra.mxu0 0.0
        %1513 = vmatprep.subr.mxu0 0.0
        %1514 = vmatpush1.msra.mxu0 0.0
        %1515 = vmatprep.subr.mxu0 0.0
        %1516 = vmatpush1.msra.mxu0 0.0
        %1517 = vmatprep.subr.mxu0 0.0
        %1518 = vmatpush1.msra.mxu0 0.0
        %1519 = vmatprep.subr.mxu0 0.0
        %1520 = vmatpush1.msra.mxu0 0.0
        %1521 = vmatprep.subr.mxu0 0.0
        %1522 = vmatpush1.msra.mxu0 0.0
        %1523 = vmatprep.subr.mxu0 0.0
        %1524 = vmatpush1.msra.mxu0 0.0
        %1525 = vmatprep.subr.mxu0 0.0
        %1526 = vmatpush1.msra.mxu0 0.0
        %1527 = vmatprep.subr.mxu0 0.0
        %1528 = vmatpush1.msra.mxu0 0.0
        %1529 = vmatprep.subr.mxu0 0.0
        %1530 = vmatpush1.msra.mxu0 0.0
        %1531 = vmatprep.subr.mxu0 0.0
        %1532 = vmatpush1.msra.mxu0 0.0
        %1533 = vmatprep.mubr.f32.mxu0 0.0
        %1534 = vmatmul.mubr.f32.gmra.mrb[0].mxu0 %v1467
        %v1535 = vpop.f32.mrb[0].mxu0
        %v1536 = vadd.f32 0.0, %v1535
        %v1537 = vpop.f32.mrb[0].mxu0
        %1538 = vdwg.mxu0
        %v1540 = vsel %vm926, %v1290, 0
        %1542 = vmatprep.subr.mxu0 0.0
        %1543 = vmatpush1.msra.mxu0 %v920
        %1544 = vmatprep.subr.mxu0 0.0
        %1545 = vmatpush1.msra.mxu0 0.0
        %1546 = vmatprep.subr.mxu0 0.0
        %1547 = vmatpush1.msra.mxu0 0.0
        %1548 = vmatprep.subr.mxu0 0.0
        %1549 = vmatpush1.msra.mxu0 0.0
        %1550 = vmatprep.subr.mxu0 0.0
        %1551 = vmatpush1.msra.mxu0 0.0
        %1552 = vmatprep.subr.mxu0 0.0
        %1553 = vmatpush1.msra.mxu0 0.0
        %1554 = vmatprep.subr.mxu0 0.0
        %1555 = vmatpush1.msra.mxu0 0.0
        %1556 = vmatprep.subr.mxu0 0.0
        %1557 = vmatpush1.msra.mxu0 0.0
        %1558 = vmatprep.subr.mxu0 0.0
        %1559 = vmatpush1.msra.mxu0 0.0
        %1560 = vmatprep.subr.mxu0 0.0
        %1561 = vmatpush1.msra.mxu0 0.0
        %1562 = vmatprep.subr.mxu0 0.0
        %1563 = vmatpush1.msra.mxu0 0.0
        %1564 = vmatprep.subr.mxu0 0.0
        %1565 = vmatpush1.msra.mxu0 0.0
        %1566 = vmatprep.subr.mxu0 0.0
        %1567 = vmatpush1.msra.mxu0 0.0
        %1568 = vmatprep.subr.mxu0 0.0
        %1569 = vmatpush1.msra.mxu0 0.0
        %1570 = vmatprep.subr.mxu0 0.0
        %1571 = vmatpush1.msra.mxu0 0.0
        %1572 = vmatprep.subr.mxu0 0.0
        %1573 = vmatpush1.msra.mxu0 0.0
        %1574 = vmatprep.subr.mxu0 0.0
        %1575 = vmatpush1.msra.mxu0 0.0
        %1576 = vmatprep.subr.mxu0 0.0
        %1577 = vmatpush1.msra.mxu0 0.0
        %1578 = vmatprep.subr.mxu0 0.0
        %1579 = vmatpush1.msra.mxu0 0.0
        %1580 = vmatprep.subr.mxu0 0.0
        %1581 = vmatpush1.msra.mxu0 0.0
        %1582 = vmatprep.subr.mxu0 0.0
        %1583 = vmatpush1.msra.mxu0 0.0
        %1584 = vmatprep.subr.mxu0 0.0
        %1585 = vmatpush1.msra.mxu0 0.0
        %1586 = vmatprep.subr.mxu0 0.0
        %1587 = vmatpush1.msra.mxu0 0.0
        %1588 = vmatprep.subr.mxu0 0.0
        %1589 = vmatpush1.msra.mxu0 0.0
        %1590 = vmatprep.subr.mxu0 0.0
        %1591 = vmatpush1.msra.mxu0 0.0
        %1592 = vmatprep.subr.mxu0 0.0
        %1593 = vmatpush1.msra.mxu0 0.0
        %1594 = vmatprep.subr.mxu0 0.0
        %1595 = vmatpush1.msra.mxu0 0.0
        %1596 = vmatprep.subr.mxu0 0.0
        %1597 = vmatpush1.msra.mxu0 0.0
        %1598 = vmatprep.subr.mxu0 0.0
        %1599 = vmatpush1.msra.mxu0 0.0
        %1600 = vmatprep.subr.mxu0 0.0
        %1601 = vmatpush1.msra.mxu0 0.0
        %1602 = vmatprep.subr.mxu0 0.0
        %1603 = vmatpush1.msra.mxu0 0.0
        %1604 = vmatprep.subr.mxu0 0.0
        %1605 = vmatpush1.msra.mxu0 0.0
        %1606 = vmatprep.mubr.f32.mxu0 0.0
        %1607 = vmatmul.mubr.f32.gmra.mrb[0].mxu0 %v1540
        %v1608 = vpop.f32.mrb[0].mxu0
        %v1609 = vadd.f32 0.0, %v1608
        %v1610 = vpop.f32.mrb[0].mxu0
        %1611 = vdwg.mxu0
        %v1612 = vld [vmem:[#allocation5] sm:$0xff]
        %v1613 = vld [vmem:[#allocation5 + $0x8] sm:$0xff]
        %v1614 = vld [vmem:[#allocation5 + $0x10] sm:$0xff]
        %v1615 = vld [vmem:[#allocation5 + $0x18] sm:$0xff]
        %1617 = vset.pattern.permute.xlu0 0
        %1618 = vperm.xlu0 %1617, %v1252
        %v1619 = vpop.permute.xlu0 %1618
        %1622 = vset.pattern.permute.xlu0 0
        %1623 = vperm.xlu0 %1622, %v1254
        %v1624 = vpop.permute.xlu0 %1623
        %1627 = vset.pattern.permute.xlu0 0
        %1628 = vperm.xlu0 %1627, %v1256
        %v1629 = vpop.permute.xlu0 %1628
        %1632 = vset.pattern.permute.xlu0 0
        %1633 = vperm.xlu0 %1632, %v1258
        %v1634 = vpop.permute.xlu0 %1633
        %v1636 = vmul.f32 %v1619, %v1612
        %v1637 = vmul.f32 %v1624, %v1613
        %v1638 = vmul.f32 %v1629, %v1614
        %v1639 = vmul.f32 %v1634, %v1615
        %v1640 = vadd.f32 %v1636, %v1390
        %v1641 = vadd.f32 %v1637, %v1463
        %v1642 = vadd.f32 %v1638, %v1536
        %v1643 = vadd.f32 %v1639, %v1609
        %1644 = vst.msk [vmem:[#allocation5] sm:$0xff] %vm926, %v1640
        %1645 = vst.msk [vmem:[#allocation5 + $0x8] sm:$0xff] %vm926, %v1641
        %1646 = vst.msk [vmem:[#allocation5 + $0x10] sm:$0xff] %vm926, %v1642
        %1647 = vst.msk [vmem:[#allocation5 + $0x18] sm:$0xff] %vm926, %v1643
        %1648 = vst.msk [vmem:[#allocation3] sm:$0xff] %vm1315, %v1243
        %1649 = vst.msk [vmem:[#allocation3 + $0x8] sm:$0xff] %vm1315, %v1244
        %1650 = vst.msk [vmem:[#allocation3 + $0x10] sm:$0xff] %vm1315, %v1245
        %1651 = vst.msk [vmem:[#allocation3 + $0x18] sm:$0xff] %vm1315, %v1246
        %p1652 = scmp.eq.s32.totalorder %s42, 1
        // Predicated region
        $region105: #{tpu_custom_call.1} parent=71 // pred_check
          %p1653 = pneg %p1652
        $region106: #{tpu_custom_call.1} parent=71 // pred_check_branch
          %1655 = sbr.rel (%p1653) target = $region108
        $region107: #{tpu_custom_call.1} parent=71 // pred_region
          %v1656 = vld [vmem:[#allocation4] sm:$0xff]
          %v1657 = vld [vmem:[#allocation4 + $0x8] sm:$0xff]
          %v1658 = vld [vmem:[#allocation4 + $0x10] sm:$0xff]
          %v1659 = vld [vmem:[#allocation4 + $0x18] sm:$0xff]
          %v1660 = vrcp.pop %v1656
          %v1661 = vrcp.pop %v1657
          %v1662 = vrcp.pop %v1658
          %v1663 = vrcp.pop %v1659
          %v1664 = vld [vmem:[#allocation5] sm:$0xff]
          %v1665 = vld [vmem:[#allocation5 + $0x8] sm:$0xff]
          %v1666 = vld [vmem:[#allocation5 + $0x10] sm:$0xff]
          %v1667 = vld [vmem:[#allocation5 + $0x18] sm:$0xff]
          %1669 = vset.pattern.permute.xlu0 0
          %1670 = vperm.xlu0 %1669, %v1660
          %v1671 = vpop.permute.xlu0 %1670
          %1674 = vset.pattern.permute.xlu0 0
          %1675 = vperm.xlu0 %1674, %v1661
          %v1676 = vpop.permute.xlu0 %1675
          %1679 = vset.pattern.permute.xlu0 0
          %1680 = vperm.xlu0 %1679, %v1662
          %v1681 = vpop.permute.xlu0 %1680
          %1684 = vset.pattern.permute.xlu0 0
          %1685 = vperm.xlu0 %1684, %v1663
          %v1686 = vpop.permute.xlu0 %1685
          %v1688 = vmul.f32 %v1664, %v1671
          %v1689 = vmul.f32 %v1665, %v1676
          %v1690 = vmul.f32 %v1666, %v1681
          %v1691 = vmul.f32 %v1667, %v1686
          %1693 = vrot.lane.b32.xlu0 %v1689, 8
          %v1694 = vpop.permute.xlu0 %1693
          %1697 = vrot.lane.b32.xlu0 %v1690, 16
          %v1698 = vpop.permute.xlu0 %1697
          %1701 = vrot.lane.b32.xlu0 %v1691, 24
          %v1702 = vpop.permute.xlu0 %1701
          %v1704 = vsel %vm926, %v1688, %v1694
          %vm1705 = vcmask 130048
          %v1706 = vsel %vm1705, %v1704, %v1698
          %vm1707 = vcmask 195584
          %v1708 = vsel %vm1707, %v1706, %v1702
          %v1709 = vld [vmem:[%s9] sm:$0xff]
          %v1710 = vld [vmem:[%s9 + $0x8] sm:$0xff]
          %v1711 = vld [vmem:[%s9 + $0x10] sm:$0xff]
          %v1712 = vld [vmem:[%s9 + $0x18] sm:$0xff]
          %v1713 = vld [vmem:[%s10] sm:$0x1]
          %v1715 = vlaneseq
          %v1716 = vshrl.u32 %v1715, 7
          %v1717 = vsub.s32 0, %v1716
          %v1718 = vrot.slane %v1713, %v1717
          %v1721 = vsel %vm746, %v1708, 0
          %1723 = vmatprep.subr.mxu0 0.0
          %1724 = vmatpush1.msra.mxu0 %v1709
          %1725 = vmatprep.subr.mxu0 0.0
          %1726 = vmatpush1.msra.mxu0 %v1710
          %1727 = vmatprep.subr.mxu0 0.0
          %1728 = vmatpush1.msra.mxu0 %v1711
          %1729 = vmatprep.subr.mxu0 0.0
          %1730 = vmatpush1.msra.mxu0 %v1712
          %1731 = vmatprep.subr.mxu0 0.0
          %1732 = vmatpush1.msra.mxu0 0.0
          %1733 = vmatprep.subr.mxu0 0.0
          %1734 = vmatpush1.msra.mxu0 0.0
          %1735 = vmatprep.subr.mxu0 0.0
          %1736 = vmatpush1.msra.mxu0 0.0
          %1737 = vmatprep.subr.mxu0 0.0
          %1738 = vmatpush1.msra.mxu0 0.0
          %1739 = vmatprep.subr.mxu0 0.0
          %1740 = vmatpush1.msra.mxu0 0.0
          %1741 = vmatprep.subr.mxu0 0.0
          %1742 = vmatpush1.msra.mxu0 0.0
          %1743 = vmatprep.subr.mxu0 0.0
          %1744 = vmatpush1.msra.mxu0 0.0
          %1745 = vmatprep.subr.mxu0 0.0
          %1746 = vmatpush1.msra.mxu0 0.0
          %1747 = vmatprep.subr.mxu0 0.0
          %1748 = vmatpush1.msra.mxu0 0.0
          %1749 = vmatprep.subr.mxu0 0.0
          %1750 = vmatpush1.msra.mxu0 0.0
          %1751 = vmatprep.subr.mxu0 0.0
          %1752 = vmatpush1.msra.mxu0 0.0
          %1753 = vmatprep.subr.mxu0 0.0
          %1754 = vmatpush1.msra.mxu0 0.0
          %1755 = vmatprep.subr.mxu0 0.0
          %1756 = vmatpush1.msra.mxu0 0.0
          %1757 = vmatprep.subr.mxu0 0.0
          %1758 = vmatpush1.msra.mxu0 0.0
          %1759 = vmatprep.subr.mxu0 0.0
          %1760 = vmatpush1.msra.mxu0 0.0
          %1761 = vmatprep.subr.mxu0 0.0
          %1762 = vmatpush1.msra.mxu0 0.0
          %1763 = vmatprep.subr.mxu0 0.0
          %1764 = vmatpush1.msra.mxu0 0.0
          %1765 = vmatprep.subr.mxu0 0.0
          %1766 = vmatpush1.msra.mxu0 0.0
          %1767 = vmatprep.subr.mxu0 0.0
          %1768 = vmatpush1.msra.mxu0 0.0
          %1769 = vmatprep.subr.mxu0 0.0
          %1770 = vmatpush1.msra.mxu0 0.0
          %1771 = vmatprep.subr.mxu0 0.0
          %1772 = vmatpush1.msra.mxu0 0.0
          %1773 = vmatprep.subr.mxu0 0.0
          %1774 = vmatpush1.msra.mxu0 0.0
          %1775 = vmatprep.subr.mxu0 0.0
          %1776 = vmatpush1.msra.mxu0 0.0
          %1777 = vmatprep.subr.mxu0 0.0
          %1778 = vmatpush1.msra.mxu0 0.0
          %1779 = vmatprep.subr.mxu0 0.0
          %1780 = vmatpush1.msra.mxu0 0.0
          %1781 = vmatprep.subr.mxu0 0.0
          %1782 = vmatpush1.msra.mxu0 0.0
          %1783 = vmatprep.subr.mxu0 0.0
          %1784 = vmatpush1.msra.mxu0 0.0
          %1785 = vmatprep.subr.mxu0 0.0
          %1786 = vmatpush1.msra.mxu0 0.0
          %1787 = vmatprep.mubr.f32.mxu0 0.0
          %1788 = vmatmul.mubr.f32.gmra.mrb[0].mxu0 %v1721
          %v1789 = vpop.f32.mrb[0].mxu0
          %v1790 = vadd.f32 %v1718, %v1789
          %v1791 = vpop.f32.mrb[0].mxu0
          %1792 = vdwg.mxu0
          %v1793 = vadd.f32 %v616, %v1790
          %v1794 = vsel %vm746, %v1793, 0.0
          %1795 = vadd.xlane.f32.xlu0 %v1794
          %v1796 = vpop.xlane.xlu0 %1795
          %v1797 = vrcp.pop 32.0
          %v1798 = vmul.f32 %v1796, %v1797
          %v1799 = vsub.f32 %v1793, %v1798
          %v1800 = vmul.f32 %v1799, %v1799
          %v1801 = vsel %vm746, %v1800, 0.0
          %1802 = vadd.xlane.f32.xlu0 %v1801
          %v1803 = vpop.xlane.xlu0 %1802
          %v1804 = vmul.f32 %v1803, %v1797
          %v1805 = vadd.f32 %v1804, 1e-05
          %v1806 = vrsqrt.pop %v1805
          %v1807 = vmul.f32 %v1799, %v1806
          %v1808 = vld [vmem:[%s11] sm:$0x1]
          %v1810 = vlaneseq
          %v1811 = vshrl.u32 %v1810, 7
          %v1812 = vsub.s32 0, %v1811
          %v1813 = vrot.slane %v1808, %v1812
          %v1815 = vmul.f32 %v1807, %v1813
          %v1816 = vld [vmem:[%s12] sm:$0x1]
          %v1818 = vlaneseq
          %v1819 = vshrl.u32 %v1818, 7
          %v1820 = vsub.s32 0, %v1819
          %v1821 = vrot.slane %v1816, %v1820
          %v1823 = vadd.f32 %v1815, %v1821
          %1824 = vst.msk [vmem:[%s615] sm:$0xff] %vm746, %v1823
        $region108: #{tpu_custom_call.1} parent=71 // pred_fallthru
          _
        %s1825 = sand.u32 %s358, 1
        %s1826 = scalar_lea.sflag [#allocation8], %s1825
        %s1827 = sand.u32 %s358, 1
        %s1828 = smul.addr %s1827, 8
        %s1829 = scalar_lea.vmem [#allocation18], %s1828
        // Predicated region
        $region109: #{tpu_custom_call.1} parent=71 // pred_check
          %p1830 = pneg %p368
        $region110: #{tpu_custom_call.1} parent=71 // pred_check_branch
          %1832 = sbr.rel (%p1830) target = $region112
        $region111: #{tpu_custom_call.1} parent=71 // pred_region
          %s1834 = ssub.s32 128, 128
          %1835 = vsyncadd %s1826, %s1834
          %s1836 = smul.addr %s40, 2
          %s1837 = sadd.s32 %s41, %s1836
          %s1838 = smul.addr %s1837, 128
          %s1839 = scalar_lea.hbm %s13, %s1838
          %s1841 = sshll.u32 %s1829, 4
          %s1842 = int_to_ptr.vmem [resolvable:$true] %s1841
          %1844 = dma.vmem_to_hbm [thread:$0]  %s1842, 128, %s1839, %s1826
        $region112: #{tpu_custom_call.1} parent=71 // pred_fallthru
          _
      $region72: #{tpu_custom_call.1} parent=5 // pred_fallthru
        _
      %p1845 = scmp.le.s32.totalorder 2, %s30
      // Predicated region
      $region113: #{tpu_custom_call.1} parent=5 // pred_check
        %p1846 = pneg %p1845
      $region114: #{tpu_custom_call.1} parent=5 // pred_check_branch
        %1848 = sbr.rel (%p1846) target = $region116
      $region115: #{tpu_custom_call.1} parent=5 // pred_region
        %s1849 = ssub.s32 %s30, 2
        // Predicated region
        $region117: #{tpu_custom_call.1} parent=115 // pred_check
          %p1850 = pneg %p374
        $region118: #{tpu_custom_call.1} parent=115 // pred_check_branch
          %1852 = sbr.rel (%p1850) target = $region120
        $region119: #{tpu_custom_call.1} parent=115 // pred_region
          %s1853 = sand.u32 %s359, 1
          %s1854 = scalar_lea.sflag [#allocation8], %s1853
          %s1855 = sand.u32 %s359, 1
          %s1856 = smul.addr %s1855, 8
          %s1857 = scalar_lea.vmem [#allocation18], %s1856
          %1858 = dma.done %s1854, 128
        $region120: #{tpu_custom_call.1} parent=115 // pred_fallthru
          _
      $region116: #{tpu_custom_call.1} parent=5 // pred_fallthru
        _
    $region6: #{tpu_custom_call.1} parent=1 // loop_footer
      %s34 = sadd.s32 1, %s30
    $region7: #{tpu_custom_call.1} parent=1 // loop_footer_branch
      %29 = sbr.rel target = $region3
    $region8: #{tpu_custom_call.1} parent=1 // loop_exit
      _
    %1859 = vsyncpa [#allocation7], 1
    %s1860 = scalar_lea.sflag [#allocation7], 1
    %1861 = vsyncpa %s1860, 1
    %1862 = vsyncpa [#allocation10], 1
    %s1863 = scalar_lea.sflag [#allocation10], 1
    %1864 = vsyncpa %s1863, 1
    %1865 = vsyncpa [#allocation13], 1
    %1866 = vsyncpa [#allocation16], 1
    %1867 = vsyncpa [#allocation8], 1
    %s1868 = scalar_lea.sflag [#allocation8], 1
    %1869 = vsyncpa %s1868, 1

</llo_original>
